<compile_context>
chip_gen: v7x
topology: tpu7x:2x2x1
jax: 0.10.0
libtpu: 0.0.40
codegen_flags: <defaults>
</compile_context>

<pallas_src>
import functools

import jax
import jax.numpy as jnp
from jax import lax
from jax.experimental import pallas as pl
from jax.experimental.pallas import tpu as pltpu


def _eblock_kernel(num_res, C, H, W, P, PAD, eps,
                   x_ref, masks_ref, w1_ref, g1_ref, b1_ref,
                   w2_ref, g2_ref, b2_ref,
                   o_ref, pad_ref):
    r = pl.program_id(0)

    @pl.when(r == 0)
    def _init():
        o_ref[...] = x_ref[...]                    # carry lives in the resident out block
        pad_ref[...] = jnp.zeros_like(pad_ref)     # zero halo; stays zero for all steps

    masks = masks_ref[...]                         # (9, P) 0/1 tap-validity masks

    def conv3x3(v, wmat):
        """3x3 'same' conv. v: (C, P) activations, wmat: (C_out, 9*C) -> (C_out, P)."""
        pad_ref[:, PAD:PAD + P] = v                # interior write (lane-aligned offset)
        cols = []
        for dy in (-1, 0, 1):
            for dx in (-1, 0, 1):
                t = (dy + 1) * 3 + (dx + 1)
                s = dy * W + dx
                piece = pad_ref[:, PAD + s:PAD + s + P]      # shifted window, (C, P)
                if not (dy == 0 and dx == 0):
                    piece = piece * masks[t:t + 1, :]        # zero out-of-image sources
                cols.append(piece)
        patch = jnp.concatenate(cols, axis=0)      # (9*C, P) im2col patch
        # Single MXU matmul per conv: (C_out, 9*C) @ (9*C, P)
        return jnp.dot(wmat, patch, preferred_element_type=jnp.float32)

    def batchnorm(y, g_ref, b_ref):
        """Training-mode BN folded to per-channel scale/bias; single reduction pass."""
        inv_p = 1.0 / P
        s1 = jnp.sum(y, axis=1, keepdims=True)               # (C, 1)
        s2 = jnp.sum(y * y, axis=1, keepdims=True)            # (C, 1)
        mean = s1 * inv_p
        var = jnp.maximum(s2 * inv_p - mean * mean, 0.0)       # biased var, clamped
        scale = g_ref[0] * lax.rsqrt(var + eps)                # (C, 1)
        bias = b_ref[0] - mean * scale                         # (C, 1)
        return y * scale + bias

    cur = o_ref[...]                               # (C, P)
    y = conv3x3(cur, w1_ref[0])
    y = jnp.maximum(batchnorm(y, g1_ref, b1_ref), 0.0)         # ReLU
    y = conv3x3(y, w2_ref[0])
    y = batchnorm(y, g2_ref, b2_ref)
    o_ref[...] = y + cur                           # residual add; carried to next block


def eblock_pallas(x_nchw, w1_oihw, g1, b1, w2_oihw, g2, b2, eps=1e-5):
    N, C, H, W = x_nchw.shape
    num_res = w1_oihw.shape[0]
    P = N * H * W
    PAD = 128                                      # lane-aligned halo for padded scratch

    # Channel-major, lane-dense activations: (C, N*H*W). (Tiny relayout; HW layout
    # then matches the kernel's lane-dense layout so the BlockSpec DMA is straight.)
    x = jnp.transpose(x_nchw, (1, 0, 2, 3)).reshape(C, P).astype(jnp.float32)

    # PyTorch OIHW -> im2col weight matrix (num_res, C_out, 9*C_in); K is ordered
    # tap-major (kh*3+kw), channel-minor to match the kernel's patch construction.
    def im2col_w(w):
        return jnp.transpose(w, (0, 1, 3, 4, 2)).reshape(
            num_res, C, 9 * C).astype(jnp.float32)
    w1 = im2col_w(w1_oihw)
    w2 = im2col_w(w2_oihw)

    g1r = g1.reshape(num_res, C, 1).astype(jnp.float32)
    b1r = b1.reshape(num_res, C, 1).astype(jnp.float32)
    g2r = g2.reshape(num_res, C, 1).astype(jnp.float32)
    b2r = b2.reshape(num_res, C, 1).astype(jnp.float32)

    # Validity masks for the 9 taps over the flattened (n, h, w) pixel axis:
    # zero wherever the shifted source pixel falls outside the HxW image (this
    # also kills cross-image leakage across batch boundaries in the flat axis).
    pix = jnp.arange(P, dtype=jnp.int32)
    hh = (pix // W) % H
    ww = pix % W
    masks = []
    for dy in (-1, 0, 1):
        for dx in (-1, 0, 1):
            valid = ((hh + dy >= 0) & (hh + dy < H) &
                     (ww + dx >= 0) & (ww + dx < W))
            masks.append(valid)
    mask_arr = jnp.stack(masks, axis=0).astype(jnp.float32)    # (9, P)

    kernel = functools.partial(_eblock_kernel, num_res, C, H, W, P, PAD, eps)

    out = pl.pallas_call(
        kernel,
        out_shape=jax.ShapeDtypeStruct((C, P), jnp.float32),
        grid_spec=pltpu.PrefetchScalarGridSpec(
            num_scalar_prefetch=0,
            grid=(num_res,),                       # one ResBlock per grid step
            in_specs=[
                pl.BlockSpec((C, P), lambda r: (0, 0)),            # x (only used at r==0)
                pl.BlockSpec((9, P), lambda r: (0, 0)),            # tap masks
                pl.BlockSpec((1, C, 9 * C), lambda r: (r, 0, 0)),  # w1[r]
                pl.BlockSpec((1, C, 1), lambda r: (r, 0, 0)),      # gamma1[r]
                pl.BlockSpec((1, C, 1), lambda r: (r, 0, 0)),      # beta1[r]
                pl.BlockSpec((1, C, 9 * C), lambda r: (r, 0, 0)),  # w2[r]
                pl.BlockSpec((1, C, 1), lambda r: (r, 0, 0)),      # gamma2[r]
                pl.BlockSpec((1, C, 1), lambda r: (r, 0, 0)),      # beta2[r]
            ],
            out_specs=pl.BlockSpec((C, P), lambda r: (0, 0)),      # resident carry/output
            scratch_shapes=[pltpu.VMEM((C, P + 2 * PAD), jnp.float32)],
        ),
        compiler_params=pltpu.CompilerParams(
            dimension_semantics=("arbitrary",)),   # carried dependence across ResBlocks
    )(x, mask_arr, w1, g1r, b1r, w2, g2r, b2r)

    return jnp.transpose(out.reshape(C, N, H, W), (1, 0, 2, 3))   # back to NCHW


def eblock_ref(x, w1_oihw, g1, b1, w2_oihw, g2, b2, eps=1e-5):
    """Pure-JAX reference with identical (training-mode BN) semantics, NCHW."""
    dn = ('NCHW', 'OIHW', 'NCHW')

    def bn(y, g, b):
        mean = jnp.mean(y, axis=(0, 2, 3), keepdims=True)
        var = jnp.mean((y - mean) ** 2, axis=(0, 2, 3), keepdims=True)
        return ((y - mean) * lax.rsqrt(var + eps) * g[None, :, None, None]
                + b[None, :, None, None])

    cur = x
    for r in range(w1_oihw.shape[0]):
        y = lax.conv_general_dilated(cur, w1_oihw[r], (1, 1), 'SAME',
                                     dimension_numbers=dn)
        y = jnp.maximum(bn(y, g1[r], b1[r]), 0.0)
        y = lax.conv_general_dilated(y, w2_oihw[r], (1, 1), 'SAME',
                                     dimension_numbers=dn)
        y = bn(y, g2[r], b2[r])
        cur = y + cur
    return cur


def init_params(key, num_res, C):
    ks = jax.random.split(key, 6)
    std = (2.0 / (C * 9)) ** 0.5
    # Conv weights in PyTorch OIHW layout (bias=False because norm=True).
    w1 = jax.random.normal(ks[0], (num_res, C, C, 3, 3), jnp.float32) * std
    w2 = jax.random.normal(ks[1], (num_res, C, C, 3, 3), jnp.float32) * std
    # BN affine params (nontrivial to exercise the math).
    g1 = jax.random.uniform(ks[2], (num_res, C), jnp.float32, 0.5, 1.5)
    b1 = jax.random.normal(ks[3], (num_res, C), jnp.float32) * 0.1
    g2 = jax.random.uniform(ks[4], (num_res, C), jnp.float32, 0.5, 1.5)
    b2 = jax.random.normal(ks[5], (num_res, C), jnp.float32) * 0.1
    return w1, g1, b1, w2, g2, b2


if __name__ == "__main__":
    N, C, H, W = 2, 8, 16, 16
    num_res = 8

    key = jax.random.PRNGKey(0)
    kx, kp = jax.random.split(key)
    x = jax.random.normal(kx, (N, C, H, W), jnp.float32)
    params = init_params(kp, num_res, C)

    out = jax.jit(eblock_pallas)(x, *params)
    out = jax.block_until_ready(out)

    ref = eblock_ref(x, *params)
    max_err = float(jnp.max(jnp.abs(out - ref)))
    if not (out.shape == (N, C, H, W) and max_err < 1e-3):
        raise AssertionError(f"mismatch vs reference: max_err={max_err}")

    print("KERNEL_OK")
</pallas_src>

<mosaic_0001>
module attributes {stable_mosaic.version = 11 : i64} {
  func.func @_eblock_kernel(%arg0: i32, %arg1: memref<8x512xf32, #tpu.memory_space<vmem>>, %arg2: memref<9x512xf32, #tpu.memory_space<vmem>>, %arg3: memref<1x8x72xf32, #tpu.memory_space<vmem>>, %arg4: memref<1x8x1xf32, #tpu.memory_space<vmem>>, %arg5: memref<1x8x1xf32, #tpu.memory_space<vmem>>, %arg6: memref<1x8x72xf32, #tpu.memory_space<vmem>>, %arg7: memref<1x8x1xf32, #tpu.memory_space<vmem>>, %arg8: memref<1x8x1xf32, #tpu.memory_space<vmem>>, %arg9: memref<8x512xf32, #tpu.memory_space<vmem>>, %arg10: memref<8x768xf32, #tpu.memory_space<vmem>>) attributes {dimension_semantics = [#tpu.dimension_semantics<arbitrary>], iteration_bounds = array<i64: 8>, scalar_prefetch = 0 : i64, scratch_operands = 1 : i64, tpu.core_type = #tpu.core_type<tc>, window_params = [{pipeline_mode = #tpu.pipeline_mode<synchronous>, transform_indices = @transform_0, window_bounds = array<i64: 8, 512>}, {pipeline_mode = #tpu.pipeline_mode<synchronous>, transform_indices = @transform_1, window_bounds = array<i64: 9, 512>}, {transform_indices = @transform_2, window_bounds = array<i64: 1, 8, 72>}, {transform_indices = @transform_3, window_bounds = array<i64: 1, 8, 1>}, {transform_indices = @transform_4, window_bounds = array<i64: 1, 8, 1>}, {transform_indices = @transform_5, window_bounds = array<i64: 1, 8, 72>}, {transform_indices = @transform_6, window_bounds = array<i64: 1, 8, 1>}, {transform_indices = @transform_7, window_bounds = array<i64: 1, 8, 1>}, {pipeline_mode = #tpu.pipeline_mode<synchronous>, transform_indices = @transform_8, window_bounds = array<i64: 8, 512>}]} {
    %c0_i32 = arith.constant 0 : i32
    %0 = arith.cmpi eq, %arg0, %c0_i32 : i32
    %1 = arith.extui %0 : i1 to i32
    %c0_i32_0 = arith.constant 0 : i32
    %2 = arith.cmpi ne, %1, %c0_i32_0 : i32
    scf.if %2 {
      %c0_69 = arith.constant 0 : index
      %c0_70 = arith.constant 0 : index
      %139 = vector.load %arg1[%c0_69, %c0_70] : memref<8x512xf32, #tpu.memory_space<vmem>>, vector<8x512xf32>
      %c0_71 = arith.constant 0 : index
      %c0_72 = arith.constant 0 : index
      %140 = vector.load %arg9[%c0_71, %c0_72] : memref<8x512xf32, #tpu.memory_space<vmem>>, vector<8x512xf32>
      tpu.vector_store %arg9[%c0_71, %c0_72], %139 {strides = array<i32>} : memref<8x512xf32, #tpu.memory_space<vmem>>, vector<8x512xf32>,
      %cst_73 = arith.constant 0.000000e+00 : f32
      %141 = vector.broadcast %cst_73 : f32 to vector<8x768xf32>
      %c0_74 = arith.constant 0 : index
      %c0_75 = arith.constant 0 : index
      %142 = vector.load %arg10[%c0_74, %c0_75] : memref<8x768xf32, #tpu.memory_space<vmem>>, vector<8x768xf32>
      tpu.vector_store %arg10[%c0_74, %c0_75], %141 {strides = array<i32>} : memref<8x768xf32, #tpu.memory_space<vmem>>, vector<8x768xf32>,
    } else {
    }
    %c0 = arith.constant 0 : index
    %c0_1 = arith.constant 0 : index
    %3 = vector.load %arg2[%c0, %c0_1] : memref<9x512xf32, #tpu.memory_space<vmem>>, vector<9x512xf32>
    %c0_2 = arith.constant 0 : index
    %c0_3 = arith.constant 0 : index
    %4 = vector.load %arg9[%c0_2, %c0_3] : memref<8x512xf32, #tpu.memory_space<vmem>>, vector<8x512xf32>
    %c0_4 = arith.constant 0 : index
    %c0_5 = arith.constant 0 : index
    %c0_6 = arith.constant 0 : index
    %5 = vector.load %arg3[%c0_4, %c0_5, %c0_6] : memref<1x8x72xf32, #tpu.memory_space<vmem>>, vector<1x8x72xf32>
    %6 = vector.shape_cast %5 : vector<1x8x72xf32> to vector<8x72xf32>
    %c0_7 = arith.constant 0 : index
    %c128 = arith.constant 128 : index
    %7 = vector.load %arg10[%c0_7, %c128] : memref<8x768xf32, #tpu.memory_space<vmem>>, vector<8x512xf32>
    tpu.vector_store %arg10[%c0_7, %c128], %4 {strides = array<i32>} : memref<8x768xf32, #tpu.memory_space<vmem>>, vector<8x512xf32>,
    %c0_8 = arith.constant 0 : index
    %c111 = arith.constant 111 : index
    %8 = vector.load %arg10[%c0_8, %c111] : memref<8x768xf32, #tpu.memory_space<vmem>>, vector<8x512xf32>
    %9 = vector.extract_strided_slice %3 {offsets = [0, 0], sizes = [1, 512], strides = [1, 1]} : vector<9x512xf32> to vector<1x512xf32>
    %10 = vector.broadcast %9 : vector<1x512xf32> to vector<8x512xf32>
    %11 = arith.mulf %8, %10 : vector<8x512xf32>
    %c0_9 = arith.constant 0 : index
    %c112 = arith.constant 112 : index
    %12 = vector.load %arg10[%c0_9, %c112] : memref<8x768xf32, #tpu.memory_space<vmem>>, vector<8x512xf32>
    %13 = vector.extract_strided_slice %3 {offsets = [1, 0], sizes = [1, 512], strides = [1, 1]} : vector<9x512xf32> to vector<1x512xf32>
    %14 = vector.broadcast %13 : vector<1x512xf32> to vector<8x512xf32>
    %15 = arith.mulf %12, %14 : vector<8x512xf32>
    %c0_10 = arith.constant 0 : index
    %c113 = arith.constant 113 : index
    %16 = vector.load %arg10[%c0_10, %c113] : memref<8x768xf32, #tpu.memory_space<vmem>>, vector<8x512xf32>
    %17 = vector.extract_strided_slice %3 {offsets = [2, 0], sizes = [1, 512], strides = [1, 1]} : vector<9x512xf32> to vector<1x512xf32>
    %18 = vector.broadcast %17 : vector<1x512xf32> to vector<8x512xf32>
    %19 = arith.mulf %16, %18 : vector<8x512xf32>
    %c0_11 = arith.constant 0 : index
    %c127 = arith.constant 127 : index
    %20 = vector.load %arg10[%c0_11, %c127] : memref<8x768xf32, #tpu.memory_space<vmem>>, vector<8x512xf32>
    %21 = vector.extract_strided_slice %3 {offsets = [3, 0], sizes = [1, 512], strides = [1, 1]} : vector<9x512xf32> to vector<1x512xf32>
    %22 = vector.broadcast %21 : vector<1x512xf32> to vector<8x512xf32>
    %23 = arith.mulf %20, %22 : vector<8x512xf32>
    %c0_12 = arith.constant 0 : index
    %c128_13 = arith.constant 128 : index
    %24 = vector.load %arg10[%c0_12, %c128_13] : memref<8x768xf32, #tpu.memory_space<vmem>>, vector<8x512xf32>
    %c0_14 = arith.constant 0 : index
    %c129 = arith.constant 129 : index
    %25 = vector.load %arg10[%c0_14, %c129] : memref<8x768xf32, #tpu.memory_space<vmem>>, vector<8x512xf32>
    %26 = vector.extract_strided_slice %3 {offsets = [5, 0], sizes = [1, 512], strides = [1, 1]} : vector<9x512xf32> to vector<1x512xf32>
    %27 = vector.broadcast %26 : vector<1x512xf32> to vector<8x512xf32>
    %28 = arith.mulf %25, %27 : vector<8x512xf32>
    %c0_15 = arith.constant 0 : index
    %c143 = arith.constant 143 : index
    %29 = vector.load %arg10[%c0_15, %c143] : memref<8x768xf32, #tpu.memory_space<vmem>>, vector<8x512xf32>
    %30 = vector.extract_strided_slice %3 {offsets = [6, 0], sizes = [1, 512], strides = [1, 1]} : vector<9x512xf32> to vector<1x512xf32>
    %31 = vector.broadcast %30 : vector<1x512xf32> to vector<8x512xf32>
    %32 = arith.mulf %29, %31 : vector<8x512xf32>
    %c0_16 = arith.constant 0 : index
    %c144 = arith.constant 144 : index
    %33 = vector.load %arg10[%c0_16, %c144] : memref<8x768xf32, #tpu.memory_space<vmem>>, vector<8x512xf32>
    %34 = vector.extract_strided_slice %3 {offsets = [7, 0], sizes = [1, 512], strides = [1, 1]} : vector<9x512xf32> to vector<1x512xf32>
    %35 = vector.broadcast %34 : vector<1x512xf32> to vector<8x512xf32>
    %36 = arith.mulf %33, %35 : vector<8x512xf32>
    %c0_17 = arith.constant 0 : index
    %c145 = arith.constant 145 : index
    %37 = vector.load %arg10[%c0_17, %c145] : memref<8x768xf32, #tpu.memory_space<vmem>>, vector<8x512xf32>
    %38 = vector.extract_strided_slice %3 {offsets = [8, 0], sizes = [1, 512], strides = [1, 1]} : vector<9x512xf32> to vector<1x512xf32>
    %39 = vector.broadcast %38 : vector<1x512xf32> to vector<8x512xf32>
    %40 = arith.mulf %37, %39 : vector<8x512xf32>
    %41 = tpu.concatenate %11, %15, %19, %23, %24, %28, %32, %36, %40 in 0 : vector<8x512xf32>, vector<8x512xf32>, vector<8x512xf32>, vector<8x512xf32>, vector<8x512xf32>, vector<8x512xf32>, vector<8x512xf32>, vector<8x512xf32>, vector<8x512xf32> -> vector<72x512xf32>
    %cst = arith.constant dense<0.000000e+00> : vector<8x512xf32>
    %42 = tpu.matmul %6, %41, %cst {dimension_numbers = #tpu.dot_dimension_numbers<[1], [0], [0], [1], [0, 0, 1, 1], [], []>} : vector<8x72xf32>, vector<72x512xf32>, vector<8x512xf32> -> vector<8x512xf32>
    %cst_18 = arith.constant dense<0.000000e+00> : vector<8xf32>
    %43 = vector.multi_reduction <add>, %42, %cst_18 [1] : vector<8x512xf32> to vector<8xf32>
    %44 = vector.shape_cast %43 : vector<8xf32> to vector<8x1xf32>
    %45 = arith.mulf %42, %42 : vector<8x512xf32>
    %cst_19 = arith.constant dense<0.000000e+00> : vector<8xf32>
    %46 = vector.multi_reduction <add>, %45, %cst_19 [1] : vector<8x512xf32> to vector<8xf32>
    %47 = vector.shape_cast %46 : vector<8xf32> to vector<8x1xf32>
    %cst_20 = arith.constant 0.001953125 : f32
    %48 = vector.broadcast %cst_20 : f32 to vector<8x1xf32>
    %49 = arith.mulf %44, %48 : vector<8x1xf32>
    %cst_21 = arith.constant 0.001953125 : f32
    %50 = vector.broadcast %cst_21 : f32 to vector<8x1xf32>
    %51 = arith.mulf %47, %50 : vector<8x1xf32>
    %52 = arith.mulf %49, %49 : vector<8x1xf32>
    %53 = arith.subf %51, %52 : vector<8x1xf32>
    %cst_22 = arith.constant 0.000000e+00 : f32
    %54 = vector.broadcast %cst_22 : f32 to vector<8x1xf32>
    %55 = arith.maximumf %53, %54 : vector<8x1xf32>
    %c0_23 = arith.constant 0 : index
    %c0_24 = arith.constant 0 : index
    %c0_25 = arith.constant 0 : index
    %56 = vector.load %arg4[%c0_23, %c0_24, %c0_25] : memref<1x8x1xf32, #tpu.memory_space<vmem>>, vector<1x8x1xf32>
    %57 = vector.shape_cast %56 : vector<1x8x1xf32> to vector<8x1xf32>
    %cst_26 = arith.constant 9.99999974E-6 : f32
    %58 = vector.broadcast %cst_26 : f32 to vector<8x1xf32>
    %59 = arith.addf %55, %58 : vector<8x1xf32>
    %60 = math.rsqrt %59 : vector<8x1xf32>
    %61 = arith.mulf %57, %60 : vector<8x1xf32>
    %c0_27 = arith.constant 0 : index
    %c0_28 = arith.constant 0 : index
    %c0_29 = arith.constant 0 : index
    %62 = vector.load %arg5[%c0_27, %c0_28, %c0_29] : memref<1x8x1xf32, #tpu.memory_space<vmem>>, vector<1x8x1xf32>
    %63 = vector.shape_cast %62 : vector<1x8x1xf32> to vector<8x1xf32>
    %64 = arith.mulf %49, %61 : vector<8x1xf32>
    %65 = arith.subf %63, %64 : vector<8x1xf32>
    %66 = vector.broadcast %61 : vector<8x1xf32> to vector<8x512xf32>
    %67 = arith.mulf %42, %66 : vector<8x512xf32>
    %68 = vector.broadcast %65 : vector<8x1xf32> to vector<8x512xf32>
    %69 = arith.addf %67, %68 : vector<8x512xf32>
    %cst_30 = arith.constant 0.000000e+00 : f32
    %70 = vector.broadcast %cst_30 : f32 to vector<8x512xf32>
    %71 = arith.maximumf %69, %70 : vector<8x512xf32>
    %c0_31 = arith.constant 0 : index
    %c0_32 = arith.constant 0 : index
    %c0_33 = arith.constant 0 : index
    %72 = vector.load %arg6[%c0_31, %c0_32, %c0_33] : memref<1x8x72xf32, #tpu.memory_space<vmem>>, vector<1x8x72xf32>
    %73 = vector.shape_cast %72 : vector<1x8x72xf32> to vector<8x72xf32>
    %c0_34 = arith.constant 0 : index
    %c128_35 = arith.constant 128 : index
    %74 = vector.load %arg10[%c0_34, %c128_35] : memref<8x768xf32, #tpu.memory_space<vmem>>, vector<8x512xf32>
    tpu.vector_store %arg10[%c0_34, %c128_35], %71 {strides = array<i32>} : memref<8x768xf32, #tpu.memory_space<vmem>>, vector<8x512xf32>,
    %c0_36 = arith.constant 0 : index
    %c111_37 = arith.constant 111 : index
    %75 = vector.load %arg10[%c0_36, %c111_37] : memref<8x768xf32, #tpu.memory_space<vmem>>, vector<8x512xf32>
    %76 = vector.extract_strided_slice %3 {offsets = [0, 0], sizes = [1, 512], strides = [1, 1]} : vector<9x512xf32> to vector<1x512xf32>
    %77 = vector.broadcast %76 : vector<1x512xf32> to vector<8x512xf32>
    %78 = arith.mulf %75, %77 : vector<8x512xf32>
    %c0_38 = arith.constant 0 : index
    %c112_39 = arith.constant 112 : index
    %79 = vector.load %arg10[%c0_38, %c112_39] : memref<8x768xf32, #tpu.memory_space<vmem>>, vector<8x512xf32>
    %80 = vector.extract_strided_slice %3 {offsets = [1, 0], sizes = [1, 512], strides = [1, 1]} : vector<9x512xf32> to vector<1x512xf32>
    %81 = vector.broadcast %80 : vector<1x512xf32> to vector<8x512xf32>
    %82 = arith.mulf %79, %81 : vector<8x512xf32>
    %c0_40 = arith.constant 0 : index
    %c113_41 = arith.constant 113 : index
    %83 = vector.load %arg10[%c0_40, %c113_41] : memref<8x768xf32, #tpu.memory_space<vmem>>, vector<8x512xf32>
    %84 = vector.extract_strided_slice %3 {offsets = [2, 0], sizes = [1, 512], strides = [1, 1]} : vector<9x512xf32> to vector<1x512xf32>
    %85 = vector.broadcast %84 : vector<1x512xf32> to vector<8x512xf32>
    %86 = arith.mulf %83, %85 : vector<8x512xf32>
    %c0_42 = arith.constant 0 : index
    %c127_43 = arith.constant 127 : index
    %87 = vector.load %arg10[%c0_42, %c127_43] : memref<8x768xf32, #tpu.memory_space<vmem>>, vector<8x512xf32>
    %88 = vector.extract_strided_slice %3 {offsets = [3, 0], sizes = [1, 512], strides = [1, 1]} : vector<9x512xf32> to vector<1x512xf32>
    %89 = vector.broadcast %88 : vector<1x512xf32> to vector<8x512xf32>
    %90 = arith.mulf %87, %89 : vector<8x512xf32>
    %c0_44 = arith.constant 0 : index
    %c128_45 = arith.constant 128 : index
    %91 = vector.load %arg10[%c0_44, %c128_45] : memref<8x768xf32, #tpu.memory_space<vmem>>, vector<8x512xf32>
    %c0_46 = arith.constant 0 : index
    %c129_47 = arith.constant 129 : index
    %92 = vector.load %arg10[%c0_46, %c129_47] : memref<8x768xf32, #tpu.memory_space<vmem>>, vector<8x512xf32>
    %93 = vector.extract_strided_slice %3 {offsets = [5, 0], sizes = [1, 512], strides = [1, 1]} : vector<9x512xf32> to vector<1x512xf32>
    %94 = vector.broadcast %93 : vector<1x512xf32> to vector<8x512xf32>
    %95 = arith.mulf %92, %94 : vector<8x512xf32>
    %c0_48 = arith.constant 0 : index
    %c143_49 = arith.constant 143 : index
    %96 = vector.load %arg10[%c0_48, %c143_49] : memref<8x768xf32, #tpu.memory_space<vmem>>, vector<8x512xf32>
    %97 = vector.extract_strided_slice %3 {offsets = [6, 0], sizes = [1, 512], strides = [1, 1]} : vector<9x512xf32> to vector<1x512xf32>
    %98 = vector.broadcast %97 : vector<1x512xf32> to vector<8x512xf32>
    %99 = arith.mulf %96, %98 : vector<8x512xf32>
    %c0_50 = arith.constant 0 : index
    %c144_51 = arith.constant 144 : index
    %100 = vector.load %arg10[%c0_50, %c144_51] : memref<8x768xf32, #tpu.memory_space<vmem>>, vector<8x512xf32>
    %101 = vector.extract_strided_slice %3 {offsets = [7, 0], sizes = [1, 512], strides = [1, 1]} : vector<9x512xf32> to vector<1x512xf32>
    %102 = vector.broadcast %101 : vector<1x512xf32> to vector<8x512xf32>
    %103 = arith.mulf %100, %102 : vector<8x512xf32>
    %c0_52 = arith.constant 0 : index
    %c145_53 = arith.constant 145 : index
    %104 = vector.load %arg10[%c0_52, %c145_53] : memref<8x768xf32, #tpu.memory_space<vmem>>, vector<8x512xf32>
    %105 = vector.extract_strided_slice %3 {offsets = [8, 0], sizes = [1, 512], strides = [1, 1]} : vector<9x512xf32> to vector<1x512xf32>
    %106 = vector.broadcast %105 : vector<1x512xf32> to vector<8x512xf32>
    %107 = arith.mulf %104, %106 : vector<8x512xf32>
    %108 = tpu.concatenate %78, %82, %86, %90, %91, %95, %99, %103, %107 in 0 : vector<8x512xf32>, vector<8x512xf32>, vector<8x512xf32>, vector<8x512xf32>, vector<8x512xf32>, vector<8x512xf32>, vector<8x512xf32>, vector<8x512xf32>, vector<8x512xf32> -> vector<72x512xf32>
    %cst_54 = arith.constant dense<0.000000e+00> : vector<8x512xf32>
    %109 = tpu.matmul %73, %108, %cst_54 {dimension_numbers = #tpu.dot_dimension_numbers<[1], [0], [0], [1], [0, 0, 1, 1], [], []>} : vector<8x72xf32>, vector<72x512xf32>, vector<8x512xf32> -> vector<8x512xf32>
    %cst_55 = arith.constant dense<0.000000e+00> : vector<8xf32>
    %110 = vector.multi_reduction <add>, %109, %cst_55 [1] : vector<8x512xf32> to vector<8xf32>
    %111 = vector.shape_cast %110 : vector<8xf32> to vector<8x1xf32>
    %112 = arith.mulf %109, %109 : vector<8x512xf32>
    %cst_56 = arith.constant dense<0.000000e+00> : vector<8xf32>
    %113 = vector.multi_reduction <add>, %112, %cst_56 [1] : vector<8x512xf32> to vector<8xf32>
    %114 = vector.shape_cast %113 : vector<8xf32> to vector<8x1xf32>
    %cst_57 = arith.constant 0.001953125 : f32
    %115 = vector.broadcast %cst_57 : f32 to vector<8x1xf32>
    %116 = arith.mulf %111, %115 : vector<8x1xf32>
    %cst_58 = arith.constant 0.001953125 : f32
    %117 = vector.broadcast %cst_58 : f32 to vector<8x1xf32>
    %118 = arith.mulf %114, %117 : vector<8x1xf32>
    %119 = arith.mulf %116, %116 : vector<8x1xf32>
    %120 = arith.subf %118, %119 : vector<8x1xf32>
    %cst_59 = arith.constant 0.000000e+00 : f32
    %121 = vector.broadcast %cst_59 : f32 to vector<8x1xf32>
    %122 = arith.maximumf %120, %121 : vector<8x1xf32>
    %c0_60 = arith.constant 0 : index
    %c0_61 = arith.constant 0 : index
    %c0_62 = arith.constant 0 : index
    %123 = vector.load %arg7[%c0_60, %c0_61, %c0_62] : memref<1x8x1xf32, #tpu.memory_space<vmem>>, vector<1x8x1xf32>
    %124 = vector.shape_cast %123 : vector<1x8x1xf32> to vector<8x1xf32>
    %cst_63 = arith.constant 9.99999974E-6 : f32
    %125 = vector.broadcast %cst_63 : f32 to vector<8x1xf32>
    %126 = arith.addf %122, %125 : vector<8x1xf32>
    %127 = math.rsqrt %126 : vector<8x1xf32>
    %128 = arith.mulf %124, %127 : vector<8x1xf32>
    %c0_64 = arith.constant 0 : index
    %c0_65 = arith.constant 0 : index
    %c0_66 = arith.constant 0 : index
    %129 = vector.load %arg8[%c0_64, %c0_65, %c0_66] : memref<1x8x1xf32, #tpu.memory_space<vmem>>, vector<1x8x1xf32>
    %130 = vector.shape_cast %129 : vector<1x8x1xf32> to vector<8x1xf32>
    %131 = arith.mulf %116, %128 : vector<8x1xf32>
    %132 = arith.subf %130, %131 : vector<8x1xf32>
    %133 = vector.broadcast %128 : vector<8x1xf32> to vector<8x512xf32>
    %134 = arith.mulf %109, %133 : vector<8x512xf32>
    %135 = vector.broadcast %132 : vector<8x1xf32> to vector<8x512xf32>
    %136 = arith.addf %134, %135 : vector<8x512xf32>
    %137 = arith.addf %136, %4 : vector<8x512xf32>
    %c0_67 = arith.constant 0 : index
    %c0_68 = arith.constant 0 : index
    %138 = vector.load %arg9[%c0_67, %c0_68] : memref<8x512xf32, #tpu.memory_space<vmem>>, vector<8x512xf32>
    tpu.vector_store %arg9[%c0_67, %c0_68], %137 {strides = array<i32>} : memref<8x512xf32, #tpu.memory_space<vmem>>, vector<8x512xf32>,
    return
  }
  func.func @transform_0(%arg0: i32) -> (i32, i32) {
    %c0_i32 = arith.constant 0 : i32
    %c0_i32_0 = arith.constant 0 : i32
    %c0_i32_1 = arith.constant 0 : i32
    return %c0_i32, %c0_i32_0 : i32, i32
  }
  func.func @transform_1(%arg0: i32) -> (i32, i32) {
    %c0_i32 = arith.constant 0 : i32
    %c0_i32_0 = arith.constant 0 : i32
    %c0_i32_1 = arith.constant 0 : i32
    return %c0_i32, %c0_i32_0 : i32, i32
  }
  func.func @transform_2(%arg0: i32) -> (i32, i32, i32) {
    %c0_i32 = arith.constant 0 : i32
    %c0_i32_0 = arith.constant 0 : i32
    %c0_i32_1 = arith.constant 0 : i32
    return %arg0, %c0_i32, %c0_i32_0 : i32, i32, i32
  }
  func.func @transform_3(%arg0: i32) -> (i32, i32, i32) {
    %c0_i32 = arith.constant 0 : i32
    %c0_i32_0 = arith.constant 0 : i32
    %c0_i32_1 = arith.constant 0 : i32
    return %arg0, %c0_i32, %c0_i32_0 : i32, i32, i32
  }
  func.func @transform_4(%arg0: i32) -> (i32, i32, i32) {
    %c0_i32 = arith.constant 0 : i32
    %c0_i32_0 = arith.constant 0 : i32
    %c0_i32_1 = arith.constant 0 : i32
    return %arg0, %c0_i32, %c0_i32_0 : i32, i32, i32
  }
  func.func @transform_5(%arg0: i32) -> (i32, i32, i32) {
    %c0_i32 = arith.constant 0 : i32
    %c0_i32_0 = arith.constant 0 : i32
    %c0_i32_1 = arith.constant 0 : i32
    return %arg0, %c0_i32, %c0_i32_0 : i32, i32, i32
  }
  func.func @transform_6(%arg0: i32) -> (i32, i32, i32) {
    %c0_i32 = arith.constant 0 : i32
    %c0_i32_0 = arith.constant 0 : i32
    %c0_i32_1 = arith.constant 0 : i32
    return %arg0, %c0_i32, %c0_i32_0 : i32, i32, i32
  }
  func.func @transform_7(%arg0: i32) -> (i32, i32, i32) {
    %c0_i32 = arith.constant 0 : i32
    %c0_i32_0 = arith.constant 0 : i32
    %c0_i32_1 = arith.constant 0 : i32
    return %arg0, %c0_i32, %c0_i32_0 : i32, i32, i32
  }
  func.func @transform_8(%arg0: i32) -> (i32, i32) {
    %c0_i32 = arith.constant 0 : i32
    %c0_i32_0 = arith.constant 0 : i32
    %c0_i32_1 = arith.constant 0 : i32
    return %c0_i32, %c0_i32_0 : i32, i32
  }
}

</mosaic_0001>

<llo_original>
// kernel: eblock_pallas.1
$region0: #{eblock_pallas.1}
  #allocation0 [shape = 'u32[]', space=smem, size = 0x4, offset = 0x4, fixed_abs, tag = 'smem constant byte address 0x4 - core index']
  #allocation1 [shape = 'u32[144,128]{1,0:T(1,128)}', space=vmem, size = 0x12000, scoped, tag = 'internal scratch']
  #allocation2 [shape = 'f32[8,768]{1,0:T(8,128)}', space=vmem, size = 0x6000, scoped, tag = 'scratch operand']
  %s0 = inlined_call_operand.vmem [shape: f32[8,512], index: 0, kind: input, shape index: {}]
  %s1 = inlined_call_operand.vmem [shape: f32[9,512], index: 1, kind: input, shape index: {}]
  %s2 = inlined_call_operand.vmem [shape: f32[8,8,72], index: 2, kind: input, shape index: {}]
  %s3 = inlined_call_operand.vmem [shape: f32[8,8,1], index: 3, kind: input, shape index: {}]
  %s4 = inlined_call_operand.vmem [shape: f32[8,8,1], index: 4, kind: input, shape index: {}]
  %s5 = inlined_call_operand.vmem [shape: f32[8,8,72], index: 5, kind: input, shape index: {}]
  %s6 = inlined_call_operand.vmem [shape: f32[8,8,1], index: 6, kind: input, shape index: {}]
  %s7 = inlined_call_operand.vmem [shape: f32[8,8,1], index: 7, kind: input, shape index: {}]
  %s8 = inlined_call_operand.vmem [shape: f32[8,512], index: 8, kind: output, shape index: {}]
  %s9 = sld [smem:[#allocation0]]
  $region69: #{eblock_pallas.1} parent=0
    _
  %s11 = ssub.s32 1, %s9
  %s12 = scalar_select 0, %s11, %s9
  loop: start=0, step=1, limit=10
  $region2: #{eblock_pallas.1} parent=0 // loop_pre_header
    _
  $region3: #{eblock_pallas.1} parent=0 // loop_header
    %s14 = sphi 0, %s18
    %p15 = scmp.ge.s32.totalorder %s14, 10
    %s22 = sphi 0, %s22
    %s24 = sphi 0, %s22
    %s25 = sphi 0, %s24
    %s39 = sphi 0, %s25
    %s43 = sphi 0, %s43
    %s45 = sphi 0, %s43
    %s46 = sphi 0, %s45
    %s60 = sphi 0, %s46
    %s66 = sphi 0, %s68
    %s69 = sphi 0, %s66
    %s70 = sphi 0, %s69
    %s86 = sphi 0, %s70
    %s92 = sphi 0, %s94
    %s95 = sphi 0, %s92
    %s96 = sphi 0, %s95
    %s112 = sphi 0, %s96
    %s118 = sphi 0, %s120
    %s121 = sphi 0, %s118
    %s122 = sphi 0, %s121
    %s138 = sphi 0, %s122
    %s144 = sphi 0, %s146
    %s147 = sphi 0, %s144
    %s148 = sphi 0, %s147
    %s164 = sphi 0, %s148
    %s170 = sphi 0, %s172
    %s173 = sphi 0, %s170
    %s174 = sphi 0, %s173
    %s190 = sphi 0, %s174
    %s196 = sphi 0, %s198
    %s199 = sphi 0, %s196
    %s200 = sphi 0, %s199
    %s216 = sphi 0, %s200
    %s220 = sphi 0, %s220
    %s222 = sphi 0, %s220
    %s223 = sphi 0, %s222
    %s237 = sphi 0, %s223
  $region4: #{eblock_pallas.1} parent=0 // loop_header_branch
    %17 = sbr.rel (%p15) target = $region8
  $region5: #{eblock_pallas.1} parent=0 // loop_body
    %s19 = ssub.s32 %s14, 1
    %s20 = ssub.s32 %s14, 2
    %s21 = sadd.s32 %s14, 1
    %s23 = sadd.s32 %s22, 1
    %p26 = scmp.eq.s32.totalorder %s14, 7
    %p27 = scmp.ne.s32.totalorder %s22, %s24
    %p28 = scmp.eq.s32.totalorder %s14, 0
    %p29 = por %p27, %p28
    %p30 = scmp.ne.s32.totalorder %s22, %s24
    %p31 = scmp.eq.s32.totalorder %s19, 7
    %p32 = por %p30, %p31
    %p33 = scmp.ne.s32.totalorder %s24, %s25
    %p34 = scmp.eq.s32.totalorder %s19, 0
    %p35 = por %p33, %p34
    %p36 = scmp.ne.s32.totalorder %s24, %s25
    %p37 = scmp.eq.s32.totalorder %s20, 7
    %p38 = por %p36, %p37
    %p40 = scmp.ne.s32.totalorder %s25, %s39
    %p41 = scmp.eq.s32.totalorder %s20, 0
    %p42 = por %p40, %p41
    %s44 = sadd.s32 %s43, 1
    %p47 = scmp.eq.s32.totalorder %s14, 7
    %p48 = scmp.ne.s32.totalorder %s43, %s45
    %p49 = scmp.eq.s32.totalorder %s14, 0
    %p50 = por %p48, %p49
    %p51 = scmp.ne.s32.totalorder %s43, %s45
    %p52 = scmp.eq.s32.totalorder %s19, 7
    %p53 = por %p51, %p52
    %p54 = scmp.ne.s32.totalorder %s45, %s46
    %p55 = scmp.eq.s32.totalorder %s19, 0
    %p56 = por %p54, %p55
    %p57 = scmp.ne.s32.totalorder %s45, %s46
    %p58 = scmp.eq.s32.totalorder %s20, 7
    %p59 = por %p57, %p58
    %p61 = scmp.ne.s32.totalorder %s46, %s60
    %p62 = scmp.eq.s32.totalorder %s20, 0
    %p63 = por %p61, %p62
    %s64 = ssub.s32 %s14, %s21
    %p65 = scmp.eq.s32.totalorder %s64, 0
    %s67 = sadd.s32 %s66, 1
    %s68 = scalar_select %p65, %s66, %s67
    %p71 = pneg %p65
    %p72 = scmp.eq.s32.totalorder %s14, 7
    %p73 = por %p71, %p72
    %p74 = scmp.ne.s32.totalorder %s66, %s69
    %p75 = scmp.eq.s32.totalorder %s14, 0
    %p76 = por %p74, %p75
    %p77 = scmp.ne.s32.totalorder %s66, %s69
    %p78 = scmp.eq.s32.totalorder %s19, 7
    %p79 = por %p77, %p78
    %p80 = scmp.ne.s32.totalorder %s69, %s70
    %p81 = scmp.eq.s32.totalorder %s19, 0
    %p82 = por %p80, %p81
    %p83 = scmp.ne.s32.totalorder %s69, %s70
    %p84 = scmp.eq.s32.totalorder %s20, 7
    %p85 = por %p83, %p84
    %p87 = scmp.ne.s32.totalorder %s70, %s86
    %p88 = scmp.eq.s32.totalorder %s20, 0
    %p89 = por %p87, %p88
    %s90 = ssub.s32 %s14, %s21
    %p91 = scmp.eq.s32.totalorder %s90, 0
    %s93 = sadd.s32 %s92, 1
    %s94 = scalar_select %p91, %s92, %s93
    %p97 = pneg %p91
    %p98 = scmp.eq.s32.totalorder %s14, 7
    %p99 = por %p97, %p98
    %p100 = scmp.ne.s32.totalorder %s92, %s95
    %p101 = scmp.eq.s32.totalorder %s14, 0
    %p102 = por %p100, %p101
    %p103 = scmp.ne.s32.totalorder %s92, %s95
    %p104 = scmp.eq.s32.totalorder %s19, 7
    %p105 = por %p103, %p104
    %p106 = scmp.ne.s32.totalorder %s95, %s96
    %p107 = scmp.eq.s32.totalorder %s19, 0
    %p108 = por %p106, %p107
    %p109 = scmp.ne.s32.totalorder %s95, %s96
    %p110 = scmp.eq.s32.totalorder %s20, 7
    %p111 = por %p109, %p110
    %p113 = scmp.ne.s32.totalorder %s96, %s112
    %p114 = scmp.eq.s32.totalorder %s20, 0
    %p115 = por %p113, %p114
    %s116 = ssub.s32 %s14, %s21
    %p117 = scmp.eq.s32.totalorder %s116, 0
    %s119 = sadd.s32 %s118, 1
    %s120 = scalar_select %p117, %s118, %s119
    %p123 = pneg %p117
    %p124 = scmp.eq.s32.totalorder %s14, 7
    %p125 = por %p123, %p124
    %p126 = scmp.ne.s32.totalorder %s118, %s121
    %p127 = scmp.eq.s32.totalorder %s14, 0
    %p128 = por %p126, %p127
    %p129 = scmp.ne.s32.totalorder %s118, %s121
    %p130 = scmp.eq.s32.totalorder %s19, 7
    %p131 = por %p129, %p130
    %p132 = scmp.ne.s32.totalorder %s121, %s122
    %p133 = scmp.eq.s32.totalorder %s19, 0
    %p134 = por %p132, %p133
    %p135 = scmp.ne.s32.totalorder %s121, %s122
    %p136 = scmp.eq.s32.totalorder %s20, 7
    %p137 = por %p135, %p136
    %p139 = scmp.ne.s32.totalorder %s122, %s138
    %p140 = scmp.eq.s32.totalorder %s20, 0
    %p141 = por %p139, %p140
    %s142 = ssub.s32 %s14, %s21
    %p143 = scmp.eq.s32.totalorder %s142, 0
    %s145 = sadd.s32 %s144, 1
    %s146 = scalar_select %p143, %s144, %s145
    %p149 = pneg %p143
    %p150 = scmp.eq.s32.totalorder %s14, 7
    %p151 = por %p149, %p150
    %p152 = scmp.ne.s32.totalorder %s144, %s147
    %p153 = scmp.eq.s32.totalorder %s14, 0
    %p154 = por %p152, %p153
    %p155 = scmp.ne.s32.totalorder %s144, %s147
    %p156 = scmp.eq.s32.totalorder %s19, 7
    %p157 = por %p155, %p156
    %p158 = scmp.ne.s32.totalorder %s147, %s148
    %p159 = scmp.eq.s32.totalorder %s19, 0
    %p160 = por %p158, %p159
    %p161 = scmp.ne.s32.totalorder %s147, %s148
    %p162 = scmp.eq.s32.totalorder %s20, 7
    %p163 = por %p161, %p162
    %p165 = scmp.ne.s32.totalorder %s148, %s164
    %p166 = scmp.eq.s32.totalorder %s20, 0
    %p167 = por %p165, %p166
    %s168 = ssub.s32 %s14, %s21
    %p169 = scmp.eq.s32.totalorder %s168, 0
    %s171 = sadd.s32 %s170, 1
    %s172 = scalar_select %p169, %s170, %s171
    %p175 = pneg %p169
    %p176 = scmp.eq.s32.totalorder %s14, 7
    %p177 = por %p175, %p176
    %p178 = scmp.ne.s32.totalorder %s170, %s173
    %p179 = scmp.eq.s32.totalorder %s14, 0
    %p180 = por %p178, %p179
    %p181 = scmp.ne.s32.totalorder %s170, %s173
    %p182 = scmp.eq.s32.totalorder %s19, 7
    %p183 = por %p181, %p182
    %p184 = scmp.ne.s32.totalorder %s173, %s174
    %p185 = scmp.eq.s32.totalorder %s19, 0
    %p186 = por %p184, %p185
    %p187 = scmp.ne.s32.totalorder %s173, %s174
    %p188 = scmp.eq.s32.totalorder %s20, 7
    %p189 = por %p187, %p188
    %p191 = scmp.ne.s32.totalorder %s174, %s190
    %p192 = scmp.eq.s32.totalorder %s20, 0
    %p193 = por %p191, %p192
    %s194 = ssub.s32 %s14, %s21
    %p195 = scmp.eq.s32.totalorder %s194, 0
    %s197 = sadd.s32 %s196, 1
    %s198 = scalar_select %p195, %s196, %s197
    %p201 = pneg %p195
    %p202 = scmp.eq.s32.totalorder %s14, 7
    %p203 = por %p201, %p202
    %p204 = scmp.ne.s32.totalorder %s196, %s199
    %p205 = scmp.eq.s32.totalorder %s14, 0
    %p206 = por %p204, %p205
    %p207 = scmp.ne.s32.totalorder %s196, %s199
    %p208 = scmp.eq.s32.totalorder %s19, 7
    %p209 = por %p207, %p208
    %p210 = scmp.ne.s32.totalorder %s199, %s200
    %p211 = scmp.eq.s32.totalorder %s19, 0
    %p212 = por %p210, %p211
    %p213 = scmp.ne.s32.totalorder %s199, %s200
    %p214 = scmp.eq.s32.totalorder %s20, 7
    %p215 = por %p213, %p214
    %p217 = scmp.ne.s32.totalorder %s200, %s216
    %p218 = scmp.eq.s32.totalorder %s20, 0
    %p219 = por %p217, %p218
    %s221 = sadd.s32 %s220, 1
    %p224 = scmp.eq.s32.totalorder %s14, 7
    %p225 = scmp.ne.s32.totalorder %s220, %s222
    %p226 = scmp.eq.s32.totalorder %s14, 0
    %p227 = por %p225, %p226
    %p228 = scmp.ne.s32.totalorder %s220, %s222
    %p229 = scmp.eq.s32.totalorder %s19, 7
    %p230 = por %p228, %p229
    %p231 = scmp.ne.s32.totalorder %s222, %s223
    %p232 = scmp.eq.s32.totalorder %s19, 0
    %p233 = por %p231, %p232
    %p234 = scmp.ne.s32.totalorder %s222, %s223
    %p235 = scmp.eq.s32.totalorder %s20, 7
    %p236 = por %p234, %p235
    %p238 = scmp.ne.s32.totalorder %s223, %s237
    %p239 = scmp.eq.s32.totalorder %s20, 0
    %p240 = por %p238, %p239
    %p241 = scmp.le.s32.totalorder 1, %s14
    %p242 = scmp.lt.s32.totalorder %s14, 9
    %p243 = pnand %p241, %p242
    %p244 = pneg %p243
    // Predicated region
    $region9: #{eblock_pallas.1} parent=5 // pred_check
      _
    $region10: #{eblock_pallas.1} parent=5 // pred_check_branch
      %246 = sbr.rel (%p243) target = $region12
    $region11: #{eblock_pallas.1} parent=5 // pred_region
      %s247 = ssub.s32 %s14, 1
      // Predicated region
      $region13: #{eblock_pallas.1} parent=11 // pred_check
        %p248 = pneg %p35
      $region14: #{eblock_pallas.1} parent=11 // pred_check_branch
        %250 = sbr.rel (%p248) target = $region16
      $region15: #{eblock_pallas.1} parent=11 // pred_region
        _
      $region16: #{eblock_pallas.1} parent=11 // pred_fallthru
        _
      // Predicated region
      $region17: #{eblock_pallas.1} parent=11 // pred_check
        %p251 = pneg %p56
      $region18: #{eblock_pallas.1} parent=11 // pred_check_branch
        %253 = sbr.rel (%p251) target = $region20
      $region19: #{eblock_pallas.1} parent=11 // pred_region
        _
      $region20: #{eblock_pallas.1} parent=11 // pred_fallthru
        _
    $region12: #{eblock_pallas.1} parent=5 // pred_fallthru
      _
    %p254 = scmp.lt.s32.totalorder %s14, 8
    // Predicated region
    $region21: #{eblock_pallas.1} parent=5 // pred_check
      %p255 = pneg %p254
    $region22: #{eblock_pallas.1} parent=5 // pred_check_branch
      %257 = sbr.rel (%p255) target = $region24
    $region23: #{eblock_pallas.1} parent=5 // pred_region
      // Predicated region
      $region25: #{eblock_pallas.1} parent=23 // pred_check
        %p258 = pneg %p76
      $region26: #{eblock_pallas.1} parent=23 // pred_check_branch
        %260 = sbr.rel (%p258) target = $region28
      $region27: #{eblock_pallas.1} parent=23 // pred_region
        %p261 = scmp.lt.s32.totalorder %s14, 7
        %s262 = scalar_select %p261, %s14, 7
        %s263 = smul.addr %s262, 8
        %s264 = scalar_lea.vmem %s2, %s263
      $region28: #{eblock_pallas.1} parent=23 // pred_fallthru
        _
      // Predicated region
      $region29: #{eblock_pallas.1} parent=23 // pred_check
        %p265 = pneg %p102
      $region30: #{eblock_pallas.1} parent=23 // pred_check_branch
        %267 = sbr.rel (%p265) target = $region32
      $region31: #{eblock_pallas.1} parent=23 // pred_region
        %p268 = scmp.lt.s32.totalorder %s14, 7
        %s269 = scalar_select %p268, %s14, 7
        %s270 = smul.addr %s269, 8
        %s271 = scalar_lea.vmem %s3, %s270
      $region32: #{eblock_pallas.1} parent=23 // pred_fallthru
        _
      // Predicated region
      $region33: #{eblock_pallas.1} parent=23 // pred_check
        %p272 = pneg %p128
      $region34: #{eblock_pallas.1} parent=23 // pred_check_branch
        %274 = sbr.rel (%p272) target = $region36
      $region35: #{eblock_pallas.1} parent=23 // pred_region
        %p275 = scmp.lt.s32.totalorder %s14, 7
        %s276 = scalar_select %p275, %s14, 7
        %s277 = smul.addr %s276, 8
        %s278 = scalar_lea.vmem %s4, %s277
      $region36: #{eblock_pallas.1} parent=23 // pred_fallthru
        _
      // Predicated region
      $region37: #{eblock_pallas.1} parent=23 // pred_check
        %p279 = pneg %p154
      $region38: #{eblock_pallas.1} parent=23 // pred_check_branch
        %281 = sbr.rel (%p279) target = $region40
      $region39: #{eblock_pallas.1} parent=23 // pred_region
        %p282 = scmp.lt.s32.totalorder %s14, 7
        %s283 = scalar_select %p282, %s14, 7
        %s284 = smul.addr %s283, 8
        %s285 = scalar_lea.vmem %s5, %s284
      $region40: #{eblock_pallas.1} parent=23 // pred_fallthru
        _
      // Predicated region
      $region41: #{eblock_pallas.1} parent=23 // pred_check
        %p286 = pneg %p180
      $region42: #{eblock_pallas.1} parent=23 // pred_check_branch
        %288 = sbr.rel (%p286) target = $region44
      $region43: #{eblock_pallas.1} parent=23 // pred_region
        %p289 = scmp.lt.s32.totalorder %s14, 7
        %s290 = scalar_select %p289, %s14, 7
        %s291 = smul.addr %s290, 8
        %s292 = scalar_lea.vmem %s6, %s291
      $region44: #{eblock_pallas.1} parent=23 // pred_fallthru
        _
      // Predicated region
      $region45: #{eblock_pallas.1} parent=23 // pred_check
        %p293 = pneg %p206
      $region46: #{eblock_pallas.1} parent=23 // pred_check_branch
        %295 = sbr.rel (%p293) target = $region48
      $region47: #{eblock_pallas.1} parent=23 // pred_region
        %p296 = scmp.lt.s32.totalorder %s14, 7
        %s297 = scalar_select %p296, %s14, 7
        %s298 = smul.addr %s297, 8
        %s299 = scalar_lea.vmem %s7, %s298
      $region48: #{eblock_pallas.1} parent=23 // pred_fallthru
        _
    $region24: #{eblock_pallas.1} parent=5 // pred_fallthru
      _
    %p300 = scmp.le.s32.totalorder 1, %s14
    %p301 = scmp.lt.s32.totalorder %s14, 9
    %p302 = pnand %p300, %p301
    %p303 = pneg %p302
    // Predicated region
    $region49: #{eblock_pallas.1} parent=5 // pred_check
      _
    $region50: #{eblock_pallas.1} parent=5 // pred_check_branch
      %305 = sbr.rel (%p302) target = $region52
    $region51: #{eblock_pallas.1} parent=5 // pred_region
      %s306 = ssub.s32 %s14, 1
      %p307 = pneg %p35
      %p308 = pneg %p32
      %p309 = pneg %p56
      %p310 = pneg %p53
      %p311 = scmp.lt.s32.totalorder %s19, 7
      %s312 = scalar_select %p311, %s19, 7
      %s313 = smul.addr %s312, 8
      %s314 = scalar_lea.vmem %s2, %s313
      %p315 = pneg %p82
      %p316 = pneg %p79
      %p317 = scmp.lt.s32.totalorder %s19, 7
      %s318 = scalar_select %p317, %s19, 7
      %s319 = smul.addr %s318, 8
      %s320 = scalar_lea.vmem %s3, %s319
      %p321 = pneg %p108
      %p322 = pneg %p105
      %p323 = scmp.lt.s32.totalorder %s19, 7
      %s324 = scalar_select %p323, %s19, 7
      %s325 = smul.addr %s324, 8
      %s326 = scalar_lea.vmem %s4, %s325
      %p327 = pneg %p134
      %p328 = pneg %p131
      %p329 = scmp.lt.s32.totalorder %s19, 7
      %s330 = scalar_select %p329, %s19, 7
      %s331 = smul.addr %s330, 8
      %s332 = scalar_lea.vmem %s5, %s331
      %p333 = pneg %p160
      %p334 = pneg %p157
      %p335 = scmp.lt.s32.totalorder %s19, 7
      %s336 = scalar_select %p335, %s19, 7
      %s337 = smul.addr %s336, 8
      %s338 = scalar_lea.vmem %s6, %s337
      %p339 = pneg %p186
      %p340 = pneg %p183
      %p341 = scmp.lt.s32.totalorder %s19, 7
      %s342 = scalar_select %p341, %s19, 7
      %s343 = smul.addr %s342, 8
      %s344 = scalar_lea.vmem %s7, %s343
      %p345 = pneg %p212
      %p346 = pneg %p209
      %p347 = pneg %p233
      %p348 = pneg %p230
      %p349 = scmp.lt.s32.totalorder %s19, 7
      %s350 = scalar_select %p349, %s19, 7
      %s351 = smul.addr %s350, 8
      %s352 = scalar_lea.vmem %s2, %s351
      %p353 = scmp.lt.s32.totalorder %s19, 7
      %s354 = scalar_select %p353, %s19, 7
      %s355 = smul.addr %s354, 8
      %s356 = scalar_lea.vmem %s3, %s355
      %p357 = scmp.lt.s32.totalorder %s19, 7
      %s358 = scalar_select %p357, %s19, 7
      %s359 = smul.addr %s358, 8
      %s360 = scalar_lea.vmem %s4, %s359
      %p361 = scmp.lt.s32.totalorder %s19, 7
      %s362 = scalar_select %p361, %s19, 7
      %s363 = smul.addr %s362, 8
      %s364 = scalar_lea.vmem %s5, %s363
      %p365 = scmp.lt.s32.totalorder %s19, 7
      %s366 = scalar_select %p365, %s19, 7
      %s367 = smul.addr %s366, 8
      %s368 = scalar_lea.vmem %s6, %s367
      %p369 = scmp.lt.s32.totalorder %s19, 7
      %s370 = scalar_select %p369, %s19, 7
      %s371 = smul.addr %s370, 8
      %s372 = scalar_lea.vmem %s7, %s371
      %p373 = scmp.eq.s32.totalorder %s19, 0
      // Predicated region
      $region53: #{eblock_pallas.1} parent=51 // pred_check
        %p374 = pneg %p373
      $region54: #{eblock_pallas.1} parent=51 // pred_check_branch
        %376 = sbr.rel (%p374) target = $region56
      $region55: #{eblock_pallas.1} parent=51 // pred_region
        %v377 = vld [vmem:[%s0] sm:$0xff]
        %v378 = vld [vmem:[%s0 + $0x8] sm:$0xff]
        %v379 = vld [vmem:[%s0 + $0x10] sm:$0xff]
        %v380 = vld [vmem:[%s0 + $0x18] sm:$0xff]
        %381 = vst [vmem:[%s8] sm:$0xff] %v377
        %382 = vst [vmem:[%s8 + $0x8] sm:$0xff] %v378
        %383 = vst [vmem:[%s8 + $0x10] sm:$0xff] %v379
        %384 = vst [vmem:[%s8 + $0x18] sm:$0xff] %v380
        %385 = vst [vmem:[#allocation2] sm:$0xff] 0.0
        %386 = vst [vmem:[#allocation2 + $0x8] sm:$0xff] 0.0
        %387 = vst [vmem:[#allocation2 + $0x10] sm:$0xff] 0.0
        %388 = vst [vmem:[#allocation2 + $0x18] sm:$0xff] 0.0
        %389 = vst [vmem:[#allocation2 + $0x20] sm:$0xff] 0.0
        %390 = vst [vmem:[#allocation2 + $0x28] sm:$0xff] 0.0
      $region56: #{eblock_pallas.1} parent=51 // pred_fallthru
        _
      %v391 = vld [vmem:[%s1] sm:$0xff]
      %v392 = vld [vmem:[%s1 + $0x8] sm:$0xff]
      %v393 = vld [vmem:[%s1 + $0x10] sm:$0xff]
      %v394 = vld [vmem:[%s1 + $0x18] sm:$0xff]
      %v395 = vld [vmem:[%s1 + $0x20] sm:$0x1]
      %v396 = vld [vmem:[%s1 + $0x28] sm:$0x1]
      %v397 = vld [vmem:[%s1 + $0x30] sm:$0x1]
      %v398 = vld [vmem:[%s1 + $0x38] sm:$0x1]
      %v399 = vld [vmem:[%s8] sm:$0xff]
      %v400 = vld [vmem:[%s8 + $0x8] sm:$0xff]
      %v401 = vld [vmem:[%s8 + $0x10] sm:$0xff]
      %v402 = vld [vmem:[%s8 + $0x18] sm:$0xff]
      %v403 = vld [vmem:[%s352] sm:$0xff]
      %404 = vst [vmem:[#allocation2 + $0x8] sm:$0xff] %v399
      %405 = vst [vmem:[#allocation2 + $0x10] sm:$0xff] %v400
      %406 = vst [vmem:[#allocation2 + $0x18] sm:$0xff] %v401
      %407 = vst [vmem:[#allocation2 + $0x20] sm:$0xff] %v402
      %v408 = vld [vmem:[#allocation2] sm:$0xff]
      %v409 = vld [vmem:[#allocation2 + $0x8] sm:$0xff]
      %v410 = vld [vmem:[#allocation2 + $0x10] sm:$0xff]
      %v411 = vld [vmem:[#allocation2 + $0x18] sm:$0xff]
      %v412 = vld [vmem:[#allocation2 + $0x20] sm:$0xff]
      %v413 = vlaneseq
      %v414 = vshrl.u32 %v413, 7
      %v415 = vsub.s32 0, %v414
      %v416 = vrot.slane %v391, %v415
      %v417 = vlaneseq
      %v418 = vshrl.u32 %v417, 7
      %v419 = vsub.s32 0, %v418
      %v420 = vrot.slane %v392, %v419
      %v421 = vlaneseq
      %v422 = vshrl.u32 %v421, 7
      %v423 = vsub.s32 0, %v422
      %v424 = vrot.slane %v393, %v423
      %v425 = vlaneseq
      %v426 = vshrl.u32 %v425, 7
      %v427 = vsub.s32 0, %v426
      %v428 = vrot.slane %v394, %v427
      %433 = vrot.lane.b32.xlu0 %v416, 111
      %v434 = vpop.permute.xlu0 %433
      %435 = vrot.lane.b32.xlu0 %v420, 111
      %v436 = vpop.permute.xlu0 %435
      %437 = vrot.lane.b32.xlu0 %v424, 111
      %v438 = vpop.permute.xlu0 %437
      %439 = vrot.lane.b32.xlu0 %v428, 111
      %v440 = vpop.permute.xlu0 %439
      %vm441 = vcmask 908288
      %v442 = vsel %vm441, %v434, %v436
      %v443 = vsel %vm441, %v436, %v438
      %v444 = vsel %vm441, %v438, %v440
      %v450 = vmul.f32 %v408, %v434
      %v451 = vmul.f32 %v409, %v442
      %v452 = vmul.f32 %v410, %v443
      %v453 = vmul.f32 %v411, %v444
      %v454 = vmul.f32 %v412, %v440
      %v455 = vlaneseq
      %v456 = vshrl.u32 %v455, 7
      %v457 = vsub.s32 1, %v456
      %v458 = vrot.slane %v391, %v457
      %v459 = vlaneseq
      %v460 = vshrl.u32 %v459, 7
      %v461 = vsub.s32 1, %v460
      %v462 = vrot.slane %v392, %v461
      %v463 = vlaneseq
      %v464 = vshrl.u32 %v463, 7
      %v465 = vsub.s32 1, %v464
      %v466 = vrot.slane %v393, %v465
      %v467 = vlaneseq
      %v468 = vshrl.u32 %v467, 7
      %v469 = vsub.s32 1, %v468
      %v470 = vrot.slane %v394, %v469
      %475 = vrot.lane.b32.xlu0 %v458, 112
      %v476 = vpop.permute.xlu0 %475
      %477 = vrot.lane.b32.xlu0 %v462, 112
      %v478 = vpop.permute.xlu0 %477
      %479 = vrot.lane.b32.xlu0 %v466, 112
      %v480 = vpop.permute.xlu0 %479
      %481 = vrot.lane.b32.xlu0 %v470, 112
      %v482 = vpop.permute.xlu0 %481
      %vm483 = vcmask 916480
      %v484 = vsel %vm483, %v476, %v478
      %v485 = vsel %vm483, %v478, %v480
      %v486 = vsel %vm483, %v480, %v482
      %v492 = vmul.f32 %v408, %v476
      %v493 = vmul.f32 %v409, %v484
      %v494 = vmul.f32 %v410, %v485
      %v495 = vmul.f32 %v411, %v486
      %v496 = vmul.f32 %v412, %v482
      %v497 = vlaneseq
      %v498 = vshrl.u32 %v497, 7
      %v499 = vsub.s32 2, %v498
      %v500 = vrot.slane %v391, %v499
      %v501 = vlaneseq
      %v502 = vshrl.u32 %v501, 7
      %v503 = vsub.s32 2, %v502
      %v504 = vrot.slane %v392, %v503
      %v505 = vlaneseq
      %v506 = vshrl.u32 %v505, 7
      %v507 = vsub.s32 2, %v506
      %v508 = vrot.slane %v393, %v507
      %v509 = vlaneseq
      %v510 = vshrl.u32 %v509, 7
      %v511 = vsub.s32 2, %v510
      %v512 = vrot.slane %v394, %v511
      %517 = vrot.lane.b32.xlu0 %v500, 113
      %v518 = vpop.permute.xlu0 %517
      %519 = vrot.lane.b32.xlu0 %v504, 113
      %v520 = vpop.permute.xlu0 %519
      %521 = vrot.lane.b32.xlu0 %v508, 113
      %v522 = vpop.permute.xlu0 %521
      %523 = vrot.lane.b32.xlu0 %v512, 113
      %v524 = vpop.permute.xlu0 %523
      %vm525 = vcmask 924672
      %v526 = vsel %vm525, %v518, %v520
      %v527 = vsel %vm525, %v520, %v522
      %v528 = vsel %vm525, %v522, %v524
      %v534 = vmul.f32 %v408, %v518
      %v535 = vmul.f32 %v409, %v526
      %v536 = vmul.f32 %v410, %v527
      %v537 = vmul.f32 %v411, %v528
      %v538 = vmul.f32 %v412, %v524
      %v539 = vlaneseq
      %v540 = vshrl.u32 %v539, 7
      %v541 = vsub.s32 3, %v540
      %v542 = vrot.slane %v391, %v541
      %v543 = vlaneseq
      %v544 = vshrl.u32 %v543, 7
      %v545 = vsub.s32 3, %v544
      %v546 = vrot.slane %v392, %v545
      %v547 = vlaneseq
      %v548 = vshrl.u32 %v547, 7
      %v549 = vsub.s32 3, %v548
      %v550 = vrot.slane %v393, %v549
      %v551 = vlaneseq
      %v552 = vshrl.u32 %v551, 7
      %v553 = vsub.s32 3, %v552
      %v554 = vrot.slane %v394, %v553
      %559 = vrot.lane.b32.xlu0 %v542, 127
      %v560 = vpop.permute.xlu0 %559
      %561 = vrot.lane.b32.xlu0 %v546, 127
      %v562 = vpop.permute.xlu0 %561
      %563 = vrot.lane.b32.xlu0 %v550, 127
      %v564 = vpop.permute.xlu0 %563
      %565 = vrot.lane.b32.xlu0 %v554, 127
      %v566 = vpop.permute.xlu0 %565
      %vm567 = vcmask 1039360
      %v568 = vsel %vm567, %v560, %v562
      %v569 = vsel %vm567, %v562, %v564
      %v570 = vsel %vm567, %v564, %v566
      %v576 = vmul.f32 %v408, %v560
      %v577 = vmul.f32 %v409, %v568
      %v578 = vmul.f32 %v410, %v569
      %v579 = vmul.f32 %v411, %v570
      %v580 = vmul.f32 %v412, %v566
      %v581 = vld [vmem:[#allocation2 + $0x8] sm:$0xff]
      %v582 = vld [vmem:[#allocation2 + $0x10] sm:$0xff]
      %v583 = vld [vmem:[#allocation2 + $0x18] sm:$0xff]
      %v584 = vld [vmem:[#allocation2 + $0x20] sm:$0xff]
      %v585 = vld [vmem:[#allocation2 + $0x28] sm:$0xff]
      %v586 = vlaneseq
      %v587 = vshrl.u32 %v586, 7
      %v588 = vsub.s32 5, %v587
      %v589 = vrot.slane %v391, %v588
      %v590 = vlaneseq
      %v591 = vshrl.u32 %v590, 7
      %v592 = vsub.s32 5, %v591
      %v593 = vrot.slane %v392, %v592
      %v594 = vlaneseq
      %v595 = vshrl.u32 %v594, 7
      %v596 = vsub.s32 5, %v595
      %v597 = vrot.slane %v393, %v596
      %v598 = vlaneseq
      %v599 = vshrl.u32 %v598, 7
      %v600 = vsub.s32 5, %v599
      %v601 = vrot.slane %v394, %v600
      %606 = vrot.lane.b32.xlu0 %v589, 1
      %v607 = vpop.permute.xlu0 %606
      %608 = vrot.lane.b32.xlu0 %v593, 1
      %v609 = vpop.permute.xlu0 %608
      %610 = vrot.lane.b32.xlu0 %v597, 1
      %v611 = vpop.permute.xlu0 %610
      %612 = vrot.lane.b32.xlu0 %v601, 1
      %v613 = vpop.permute.xlu0 %612
      %vm614 = vcmask 7168
      %v615 = vsel %vm614, %v607, %v609
      %v616 = vsel %vm614, %v609, %v611
      %v617 = vsel %vm614, %v611, %v613
      %v623 = vmul.f32 %v581, %v607
      %v624 = vmul.f32 %v582, %v615
      %v625 = vmul.f32 %v583, %v616
      %v626 = vmul.f32 %v584, %v617
      %v627 = vmul.f32 %v585, %v613
      %v628 = vlaneseq
      %v629 = vshrl.u32 %v628, 7
      %v630 = vsub.s32 6, %v629
      %v631 = vrot.slane %v391, %v630
      %v632 = vlaneseq
      %v633 = vshrl.u32 %v632, 7
      %v634 = vsub.s32 6, %v633
      %v635 = vrot.slane %v392, %v634
      %v636 = vlaneseq
      %v637 = vshrl.u32 %v636, 7
      %v638 = vsub.s32 6, %v637
      %v639 = vrot.slane %v393, %v638
      %v640 = vlaneseq
      %v641 = vshrl.u32 %v640, 7
      %v642 = vsub.s32 6, %v641
      %v643 = vrot.slane %v394, %v642
      %648 = vrot.lane.b32.xlu0 %v631, 15
      %v649 = vpop.permute.xlu0 %648
      %650 = vrot.lane.b32.xlu0 %v635, 15
      %v651 = vpop.permute.xlu0 %650
      %652 = vrot.lane.b32.xlu0 %v639, 15
      %v653 = vpop.permute.xlu0 %652
      %654 = vrot.lane.b32.xlu0 %v643, 15
      %v655 = vpop.permute.xlu0 %654
      %vm656 = vcmask 121856
      %v657 = vsel %vm656, %v649, %v651
      %v658 = vsel %vm656, %v651, %v653
      %v659 = vsel %vm656, %v653, %v655
      %v665 = vmul.f32 %v581, %v649
      %v666 = vmul.f32 %v582, %v657
      %v667 = vmul.f32 %v583, %v658
      %v668 = vmul.f32 %v584, %v659
      %v669 = vmul.f32 %v585, %v655
      %v670 = vlaneseq
      %v671 = vshrl.u32 %v670, 7
      %v672 = vsub.s32 7, %v671
      %v673 = vrot.slane %v391, %v672
      %v674 = vlaneseq
      %v675 = vshrl.u32 %v674, 7
      %v676 = vsub.s32 7, %v675
      %v677 = vrot.slane %v392, %v676
      %v678 = vlaneseq
      %v679 = vshrl.u32 %v678, 7
      %v680 = vsub.s32 7, %v679
      %v681 = vrot.slane %v393, %v680
      %v682 = vlaneseq
      %v683 = vshrl.u32 %v682, 7
      %v684 = vsub.s32 7, %v683
      %v685 = vrot.slane %v394, %v684
      %690 = vrot.lane.b32.xlu0 %v673, 16
      %v691 = vpop.permute.xlu0 %690
      %692 = vrot.lane.b32.xlu0 %v677, 16
      %v693 = vpop.permute.xlu0 %692
      %694 = vrot.lane.b32.xlu0 %v681, 16
      %v695 = vpop.permute.xlu0 %694
      %696 = vrot.lane.b32.xlu0 %v685, 16
      %v697 = vpop.permute.xlu0 %696
      %vm698 = vcmask 130048
      %v699 = vsel %vm698, %v691, %v693
      %v700 = vsel %vm698, %v693, %v695
      %v701 = vsel %vm698, %v695, %v697
      %v707 = vmul.f32 %v581, %v691
      %v708 = vmul.f32 %v582, %v699
      %v709 = vmul.f32 %v583, %v700
      %v710 = vmul.f32 %v584, %v701
      %v711 = vmul.f32 %v585, %v697
      %v712 = vlaneseq
      %v713 = vshrl.u32 %v712, 7
      %v714 = vsub.s32 0, %v713
      %v715 = vrot.slane %v395, %v714
      %v716 = vlaneseq
      %v717 = vshrl.u32 %v716, 7
      %v718 = vsub.s32 0, %v717
      %v719 = vrot.slane %v396, %v718
      %v720 = vlaneseq
      %v721 = vshrl.u32 %v720, 7
      %v722 = vsub.s32 0, %v721
      %v723 = vrot.slane %v397, %v722
      %v724 = vlaneseq
      %v725 = vshrl.u32 %v724, 7
      %v726 = vsub.s32 0, %v725
      %v727 = vrot.slane %v398, %v726
      %732 = vrot.lane.b32.xlu0 %v715, 17
      %v733 = vpop.permute.xlu0 %732
      %734 = vrot.lane.b32.xlu0 %v719, 17
      %v735 = vpop.permute.xlu0 %734
      %736 = vrot.lane.b32.xlu0 %v723, 17
      %v737 = vpop.permute.xlu0 %736
      %738 = vrot.lane.b32.xlu0 %v727, 17
      %v739 = vpop.permute.xlu0 %738
      %vm740 = vcmask 138240
      %v741 = vsel %vm740, %v733, %v735
      %v742 = vsel %vm740, %v735, %v737
      %v743 = vsel %vm740, %v737, %v739
      %v749 = vmul.f32 %v581, %v733
      %v750 = vmul.f32 %v582, %v741
      %v751 = vmul.f32 %v583, %v742
      %v752 = vmul.f32 %v584, %v743
      %v753 = vmul.f32 %v585, %v739
      %759 = vrot.lane.b32.xlu0 %v492, 127
      %v760 = vpop.permute.xlu0 %759
      %761 = vrot.lane.b32.xlu0 %v493, 127
      %v762 = vpop.permute.xlu0 %761
      %763 = vrot.lane.b32.xlu0 %v494, 127
      %v764 = vpop.permute.xlu0 %763
      %765 = vrot.lane.b32.xlu0 %v495, 127
      %v766 = vpop.permute.xlu0 %765
      %767 = vrot.lane.b32.xlu0 %v496, 127
      %v768 = vpop.permute.xlu0 %767
      %v769 = vsel %vm567, %v760, %v762
      %v770 = vsel %vm567, %v762, %v764
      %v771 = vsel %vm567, %v764, %v766
      %v772 = vsel %vm567, %v766, %v768
      %778 = vrot.lane.b32.xlu0 %v534, 126
      %v779 = vpop.permute.xlu0 %778
      %780 = vrot.lane.b32.xlu0 %v535, 126
      %v781 = vpop.permute.xlu0 %780
      %782 = vrot.lane.b32.xlu0 %v536, 126
      %v783 = vpop.permute.xlu0 %782
      %784 = vrot.lane.b32.xlu0 %v537, 126
      %v785 = vpop.permute.xlu0 %784
      %786 = vrot.lane.b32.xlu0 %v538, 126
      %v787 = vpop.permute.xlu0 %786
      %vm788 = vcmask 1031168
      %v789 = vsel %vm788, %v779, %v781
      %v790 = vsel %vm788, %v781, %v783
      %v791 = vsel %vm788, %v783, %v785
      %v792 = vsel %vm788, %v785, %v787
      %798 = vrot.lane.b32.xlu0 %v576, 112
      %v799 = vpop.permute.xlu0 %798
      %800 = vrot.lane.b32.xlu0 %v577, 112
      %v801 = vpop.permute.xlu0 %800
      %802 = vrot.lane.b32.xlu0 %v578, 112
      %v803 = vpop.permute.xlu0 %802
      %804 = vrot.lane.b32.xlu0 %v579, 112
      %v805 = vpop.permute.xlu0 %804
      %806 = vrot.lane.b32.xlu0 %v580, 112
      %v807 = vpop.permute.xlu0 %806
      %v808 = vsel %vm483, %v799, %v801
      %v809 = vsel %vm483, %v801, %v803
      %v810 = vsel %vm483, %v803, %v805
      %v811 = vsel %vm483, %v805, %v807
      %816 = vrot.lane.b32.xlu0 %v409, 111
      %v817 = vpop.permute.xlu0 %816
      %818 = vrot.lane.b32.xlu0 %v410, 111
      %v819 = vpop.permute.xlu0 %818
      %820 = vrot.lane.b32.xlu0 %v411, 111
      %v821 = vpop.permute.xlu0 %820
      %822 = vrot.lane.b32.xlu0 %v412, 111
      %v823 = vpop.permute.xlu0 %822
      %v824 = vsel %vm441, %v817, %v819
      %v825 = vsel %vm441, %v819, %v821
      %v826 = vsel %vm441, %v821, %v823
      %832 = vrot.lane.b32.xlu0 %v623, 110
      %v833 = vpop.permute.xlu0 %832
      %834 = vrot.lane.b32.xlu0 %v624, 110
      %v835 = vpop.permute.xlu0 %834
      %836 = vrot.lane.b32.xlu0 %v625, 110
      %v837 = vpop.permute.xlu0 %836
      %838 = vrot.lane.b32.xlu0 %v626, 110
      %v839 = vpop.permute.xlu0 %838
      %840 = vrot.lane.b32.xlu0 %v627, 110
      %v841 = vpop.permute.xlu0 %840
      %vm842 = vcmask 900096
      %v843 = vsel %vm842, %v833, %v835
      %v844 = vsel %vm842, %v835, %v837
      %v845 = vsel %vm842, %v837, %v839
      %v846 = vsel %vm842, %v839, %v841
      %852 = vrot.lane.b32.xlu0 %v665, 96
      %v853 = vpop.permute.xlu0 %852
      %854 = vrot.lane.b32.xlu0 %v666, 96
      %v855 = vpop.permute.xlu0 %854
      %856 = vrot.lane.b32.xlu0 %v667, 96
      %v857 = vpop.permute.xlu0 %856
      %858 = vrot.lane.b32.xlu0 %v668, 96
      %v859 = vpop.permute.xlu0 %858
      %860 = vrot.lane.b32.xlu0 %v669, 96
      %v861 = vpop.permute.xlu0 %860
      %vm862 = vcmask 785408
      %v863 = vsel %vm862, %v853, %v855
      %v864 = vsel %vm862, %v855, %v857
      %v865 = vsel %vm862, %v857, %v859
      %v866 = vsel %vm862, %v859, %v861
      %872 = vrot.lane.b32.xlu0 %v707, 95
      %v873 = vpop.permute.xlu0 %872
      %874 = vrot.lane.b32.xlu0 %v708, 95
      %v875 = vpop.permute.xlu0 %874
      %876 = vrot.lane.b32.xlu0 %v709, 95
      %v877 = vpop.permute.xlu0 %876
      %878 = vrot.lane.b32.xlu0 %v710, 95
      %v879 = vpop.permute.xlu0 %878
      %880 = vrot.lane.b32.xlu0 %v711, 95
      %v881 = vpop.permute.xlu0 %880
      %vm882 = vcmask 777216
      %v883 = vsel %vm882, %v873, %v875
      %v884 = vsel %vm882, %v875, %v877
      %v885 = vsel %vm882, %v877, %v879
      %v886 = vsel %vm882, %v879, %v881
      %892 = vrot.lane.b32.xlu0 %v749, 94
      %v893 = vpop.permute.xlu0 %892
      %894 = vrot.lane.b32.xlu0 %v750, 94
      %v895 = vpop.permute.xlu0 %894
      %896 = vrot.lane.b32.xlu0 %v751, 94
      %v897 = vpop.permute.xlu0 %896
      %898 = vrot.lane.b32.xlu0 %v752, 94
      %v899 = vpop.permute.xlu0 %898
      %900 = vrot.lane.b32.xlu0 %v753, 94
      %v901 = vpop.permute.xlu0 %900
      %vm902 = vcmask 769024
      %v903 = vsel %vm902, %v893, %v895
      %v904 = vsel %vm902, %v895, %v897
      %v905 = vsel %vm902, %v897, %v899
      %v906 = vsel %vm902, %v899, %v901
      %912 = vrot.lane.b32.xlu0 %v450, 17
      %v913 = vpop.permute.xlu0 %912
      %914 = vrot.lane.b32.xlu0 %v451, 17
      %v915 = vpop.permute.xlu0 %914
      %916 = vrot.lane.b32.xlu0 %v452, 17
      %v917 = vpop.permute.xlu0 %916
      %918 = vrot.lane.b32.xlu0 %v453, 17
      %v919 = vpop.permute.xlu0 %918
      %920 = vrot.lane.b32.xlu0 %v454, 17
      %v921 = vpop.permute.xlu0 %920
      %922 = vrot.lane.b32.xlu0 %v769, 17
      %v923 = vpop.permute.xlu0 %922
      %924 = vrot.lane.b32.xlu0 %v770, 17
      %v925 = vpop.permute.xlu0 %924
      %926 = vrot.lane.b32.xlu0 %v771, 17
      %v927 = vpop.permute.xlu0 %926
      %928 = vrot.lane.b32.xlu0 %v772, 17
      %v929 = vpop.permute.xlu0 %928
      %930 = vrot.lane.b32.xlu0 %v768, 17
      %v931 = vpop.permute.xlu0 %930
      %932 = vrot.lane.b32.xlu0 %v789, 17
      %v933 = vpop.permute.xlu0 %932
      %934 = vrot.lane.b32.xlu0 %v790, 17
      %v935 = vpop.permute.xlu0 %934
      %936 = vrot.lane.b32.xlu0 %v791, 17
      %v937 = vpop.permute.xlu0 %936
      %938 = vrot.lane.b32.xlu0 %v792, 17
      %v939 = vpop.permute.xlu0 %938
      %940 = vrot.lane.b32.xlu0 %v787, 17
      %v941 = vpop.permute.xlu0 %940
      %942 = vrot.lane.b32.xlu0 %v808, 17
      %v943 = vpop.permute.xlu0 %942
      %944 = vrot.lane.b32.xlu0 %v809, 17
      %v945 = vpop.permute.xlu0 %944
      %946 = vrot.lane.b32.xlu0 %v810, 17
      %v947 = vpop.permute.xlu0 %946
      %948 = vrot.lane.b32.xlu0 %v811, 17
      %v949 = vpop.permute.xlu0 %948
      %950 = vrot.lane.b32.xlu0 %v807, 17
      %v951 = vpop.permute.xlu0 %950
      %952 = vrot.lane.b32.xlu0 %v817, 17
      %v953 = vpop.permute.xlu0 %952
      %954 = vrot.lane.b32.xlu0 %v824, 17
      %v955 = vpop.permute.xlu0 %954
      %956 = vrot.lane.b32.xlu0 %v825, 17
      %v957 = vpop.permute.xlu0 %956
      %958 = vrot.lane.b32.xlu0 %v826, 17
      %v959 = vpop.permute.xlu0 %958
      %960 = vrot.lane.b32.xlu0 %v823, 17
      %v961 = vpop.permute.xlu0 %960
      %962 = vrot.lane.b32.xlu0 %v833, 17
      %v963 = vpop.permute.xlu0 %962
      %964 = vrot.lane.b32.xlu0 %v843, 17
      %v965 = vpop.permute.xlu0 %964
      %966 = vrot.lane.b32.xlu0 %v844, 17
      %v967 = vpop.permute.xlu0 %966
      %968 = vrot.lane.b32.xlu0 %v845, 17
      %v969 = vpop.permute.xlu0 %968
      %970 = vrot.lane.b32.xlu0 %v846, 17
      %v971 = vpop.permute.xlu0 %970
      %972 = vrot.lane.b32.xlu0 %v853, 17
      %v973 = vpop.permute.xlu0 %972
      %974 = vrot.lane.b32.xlu0 %v863, 17
      %v975 = vpop.permute.xlu0 %974
      %976 = vrot.lane.b32.xlu0 %v864, 17
      %v977 = vpop.permute.xlu0 %976
      %978 = vrot.lane.b32.xlu0 %v865, 17
      %v979 = vpop.permute.xlu0 %978
      %980 = vrot.lane.b32.xlu0 %v866, 17
      %v981 = vpop.permute.xlu0 %980
      %982 = vrot.lane.b32.xlu0 %v873, 17
      %v983 = vpop.permute.xlu0 %982
      %984 = vrot.lane.b32.xlu0 %v883, 17
      %v985 = vpop.permute.xlu0 %984
      %986 = vrot.lane.b32.xlu0 %v884, 17
      %v987 = vpop.permute.xlu0 %986
      %988 = vrot.lane.b32.xlu0 %v885, 17
      %v989 = vpop.permute.xlu0 %988
      %990 = vrot.lane.b32.xlu0 %v886, 17
      %v991 = vpop.permute.xlu0 %990
      %992 = vrot.lane.b32.xlu0 %v893, 17
      %v993 = vpop.permute.xlu0 %992
      %994 = vrot.lane.b32.xlu0 %v903, 17
      %v995 = vpop.permute.xlu0 %994
      %996 = vrot.lane.b32.xlu0 %v904, 17
      %v997 = vpop.permute.xlu0 %996
      %998 = vrot.lane.b32.xlu0 %v905, 17
      %v999 = vpop.permute.xlu0 %998
      %1000 = vrot.lane.b32.xlu0 %v906, 17
      %v1001 = vpop.permute.xlu0 %1000
      %v1002 = vsel %vm740, %v913, %v915
      %v1003 = vsel %vm740, %v915, %v917
      %v1004 = vsel %vm740, %v917, %v919
      %v1005 = vsel %vm740, %v919, %v921
      %v1006 = vsel %vm740, %v923, %v925
      %v1007 = vsel %vm740, %v925, %v927
      %v1008 = vsel %vm740, %v927, %v929
      %v1009 = vsel %vm740, %v929, %v931
      %v1010 = vsel %vm740, %v933, %v935
      %v1011 = vsel %vm740, %v935, %v937
      %v1012 = vsel %vm740, %v937, %v939
      %v1013 = vsel %vm740, %v939, %v941
      %v1014 = vsel %vm740, %v943, %v945
      %v1015 = vsel %vm740, %v945, %v947
      %v1016 = vsel %vm740, %v947, %v949
      %v1017 = vsel %vm740, %v949, %v951
      %v1018 = vsel %vm740, %v953, %v955
      %v1019 = vsel %vm740, %v955, %v957
      %v1020 = vsel %vm740, %v957, %v959
      %v1021 = vsel %vm740, %v959, %v961
      %v1022 = vsel %vm740, %v963, %v965
      %v1023 = vsel %vm740, %v965, %v967
      %v1024 = vsel %vm740, %v967, %v969
      %v1025 = vsel %vm740, %v969, %v971
      %v1026 = vsel %vm740, %v973, %v975
      %v1027 = vsel %vm740, %v975, %v977
      %v1028 = vsel %vm740, %v977, %v979
      %v1029 = vsel %vm740, %v979, %v981
      %v1030 = vsel %vm740, %v983, %v985
      %v1031 = vsel %vm740, %v985, %v987
      %v1032 = vsel %vm740, %v987, %v989
      %v1033 = vsel %vm740, %v989, %v991
      %v1034 = vsel %vm740, %v993, %v995
      %v1035 = vsel %vm740, %v995, %v997
      %v1036 = vsel %vm740, %v997, %v999
      %v1037 = vsel %vm740, %v999, %v1001
      %vm1074 = vcmask 588800
      %v1076 = vsel %vm1074, %v403, 0
      %1078 = vmatprep.subr.mxu0 %v1003
      %1079 = vmatpush1.msra.mxu0 %v1002
      %1080 = vmatprep.subr.mxu0 %v1007
      %1081 = vmatpush1.msra.mxu0 %v1006
      %1082 = vmatprep.subr.mxu0 %v1011
      %1083 = vmatpush1.msra.mxu0 %v1010
      %1084 = vmatprep.subr.mxu0 %v1015
      %1085 = vmatpush1.msra.mxu0 %v1014
      %1086 = vmatprep.subr.mxu0 %v1019
      %1087 = vmatpush1.msra.mxu0 %v1018
      %1088 = vmatprep.subr.mxu0 %v1023
      %1089 = vmatpush1.msra.mxu0 %v1022
      %1090 = vmatprep.subr.mxu0 %v1027
      %1091 = vmatpush1.msra.mxu0 %v1026
      %1092 = vmatprep.subr.mxu0 %v1031
      %1093 = vmatpush1.msra.mxu0 %v1030
      %1094 = vmatprep.subr.mxu0 %v1035
      %1095 = vmatpush1.msra.mxu0 %v1034
      %1096 = vmatprep.subr.mxu0 0.0
      %1097 = vmatpush1.msra.mxu0 0.0
      %1098 = vmatprep.subr.mxu0 0.0
      %1099 = vmatpush1.msra.mxu0 0.0
      %1100 = vmatprep.subr.mxu0 0.0
      %1101 = vmatpush1.msra.mxu0 0.0
      %1102 = vmatprep.subr.mxu0 0.0
      %1103 = vmatpush1.msra.mxu0 0.0
      %1104 = vmatprep.subr.mxu0 0.0
      %1105 = vmatpush1.msra.mxu0 0.0
      %1106 = vmatprep.subr.mxu0 0.0
      %1107 = vmatpush1.msra.mxu0 0.0
      %1108 = vmatprep.subr.mxu0 0.0
      %1109 = vmatpush1.msra.mxu0 0.0
      %1110 = vmatprep.subr.mxu0 0.0
      %1111 = vmatpush1.msra.mxu0 0.0
      %1112 = vmatprep.subr.mxu0 0.0
      %1113 = vmatpush1.msra.mxu0 0.0
      %1114 = vmatprep.subr.mxu0 0.0
      %1115 = vmatpush1.msra.mxu0 0.0
      %1116 = vmatprep.subr.mxu0 0.0
      %1117 = vmatpush1.msra.mxu0 0.0
      %1118 = vmatprep.subr.mxu0 0.0
      %1119 = vmatpush1.msra.mxu0 0.0
      %1120 = vmatprep.subr.mxu0 0.0
      %1121 = vmatpush1.msra.mxu0 0.0
      %1122 = vmatprep.subr.mxu0 0.0
      %1123 = vmatpush1.msra.mxu0 0.0
      %1124 = vmatprep.subr.mxu0 0.0
      %1125 = vmatpush1.msra.mxu0 0.0
      %1126 = vmatprep.subr.mxu0 0.0
      %1127 = vmatpush1.msra.mxu0 0.0
      %1128 = vmatprep.subr.mxu0 0.0
      %1129 = vmatpush1.msra.mxu0 0.0
      %1130 = vmatprep.subr.mxu0 0.0
      %1131 = vmatpush1.msra.mxu0 0.0
      %1132 = vmatprep.subr.mxu0 0.0
      %1133 = vmatpush1.msra.mxu0 0.0
      %1134 = vmatprep.subr.mxu0 0.0
      %1135 = vmatpush1.msra.mxu0 0.0
      %1136 = vmatprep.subr.mxu0 0.0
      %1137 = vmatpush1.msra.mxu0 0.0
      %1138 = vmatprep.subr.mxu0 0.0
      %1139 = vmatpush1.msra.mxu0 0.0
      %1140 = vmatprep.subr.mxu0 0.0
      %1141 = vmatpush1.msra.mxu0 0.0
      %1142 = vmatprep.mubr.f32.mxu0 0.0
      %1143 = vmatmul.mubr.f32.gmra.mrb[0].mxu0 %v1076
      %v1144 = vpop.f32.mrb[0].mxu0
      %v1145 = vadd.f32 0.0, %v1144
      %v1146 = vpop.f32.mrb[0].mxu0
      %v1147 = vadd.f32 0.0, %v1146
      %1148 = vdwg.mxu0
      %1149 = vmatprep.subr.mxu0 %v1005
      %1150 = vmatpush1.msra.mxu0 %v1004
      %1151 = vmatprep.subr.mxu0 %v1009
      %1152 = vmatpush1.msra.mxu0 %v1008
      %1153 = vmatprep.subr.mxu0 %v1013
      %1154 = vmatpush1.msra.mxu0 %v1012
      %1155 = vmatprep.subr.mxu0 %v1017
      %1156 = vmatpush1.msra.mxu0 %v1016
      %1157 = vmatprep.subr.mxu0 %v1021
      %1158 = vmatpush1.msra.mxu0 %v1020
      %1159 = vmatprep.subr.mxu0 %v1025
      %1160 = vmatpush1.msra.mxu0 %v1024
      %1161 = vmatprep.subr.mxu0 %v1029
      %1162 = vmatpush1.msra.mxu0 %v1028
      %1163 = vmatprep.subr.mxu0 %v1033
      %1164 = vmatpush1.msra.mxu0 %v1032
      %1165 = vmatprep.subr.mxu0 %v1037
      %1166 = vmatpush1.msra.mxu0 %v1036
      %1167 = vmatprep.subr.mxu0 0.0
      %1168 = vmatpush1.msra.mxu0 0.0
      %1169 = vmatprep.subr.mxu0 0.0
      %1170 = vmatpush1.msra.mxu0 0.0
      %1171 = vmatprep.subr.mxu0 0.0
      %1172 = vmatpush1.msra.mxu0 0.0
      %1173 = vmatprep.subr.mxu0 0.0
      %1174 = vmatpush1.msra.mxu0 0.0
      %1175 = vmatprep.subr.mxu0 0.0
      %1176 = vmatpush1.msra.mxu0 0.0
      %1177 = vmatprep.subr.mxu0 0.0
      %1178 = vmatpush1.msra.mxu0 0.0
      %1179 = vmatprep.subr.mxu0 0.0
      %1180 = vmatpush1.msra.mxu0 0.0
      %1181 = vmatprep.subr.mxu0 0.0
      %1182 = vmatpush1.msra.mxu0 0.0
      %1183 = vmatprep.subr.mxu0 0.0
      %1184 = vmatpush1.msra.mxu0 0.0
      %1185 = vmatprep.subr.mxu0 0.0
      %1186 = vmatpush1.msra.mxu0 0.0
      %1187 = vmatprep.subr.mxu0 0.0
      %1188 = vmatpush1.msra.mxu0 0.0
      %1189 = vmatprep.subr.mxu0 0.0
      %1190 = vmatpush1.msra.mxu0 0.0
      %1191 = vmatprep.subr.mxu0 0.0
      %1192 = vmatpush1.msra.mxu0 0.0
      %1193 = vmatprep.subr.mxu0 0.0
      %1194 = vmatpush1.msra.mxu0 0.0
      %1195 = vmatprep.subr.mxu0 0.0
      %1196 = vmatpush1.msra.mxu0 0.0
      %1197 = vmatprep.subr.mxu0 0.0
      %1198 = vmatpush1.msra.mxu0 0.0
      %1199 = vmatprep.subr.mxu0 0.0
      %1200 = vmatpush1.msra.mxu0 0.0
      %1201 = vmatprep.subr.mxu0 0.0
      %1202 = vmatpush1.msra.mxu0 0.0
      %1203 = vmatprep.subr.mxu0 0.0
      %1204 = vmatpush1.msra.mxu0 0.0
      %1205 = vmatprep.subr.mxu0 0.0
      %1206 = vmatpush1.msra.mxu0 0.0
      %1207 = vmatprep.subr.mxu0 0.0
      %1208 = vmatpush1.msra.mxu0 0.0
      %1209 = vmatprep.subr.mxu0 0.0
      %1210 = vmatpush1.msra.mxu0 0.0
      %1211 = vmatprep.subr.mxu0 0.0
      %1212 = vmatpush1.msra.mxu0 0.0
      %1213 = vmatprep.mubr.f32.mxu0 0.0
      %1214 = vmatmul.mubr.f32.gmra.mrb[0].mxu0 %v1076
      %v1215 = vpop.f32.mrb[0].mxu0
      %v1216 = vadd.f32 0.0, %v1215
      %v1217 = vpop.f32.mrb[0].mxu0
      %v1218 = vadd.f32 0.0, %v1217
      %1219 = vdwg.mxu0
      %v1220 = vadd.f32 %v1145, %v1147
      %v1221 = vadd.f32 %v1220, %v1216
      %v1222 = vadd.f32 %v1221, %v1218
      %1223 = vadd.xlane.f32.xlu0 %v1222
      %v1224 = vpop.xlane.xlu0 %1223
      %v1225 = vmul.f32 %v1145, %v1145
      %v1226 = vmul.f32 %v1147, %v1147
      %v1227 = vmul.f32 %v1216, %v1216
      %v1228 = vmul.f32 %v1218, %v1218
      %v1229 = vadd.f32 %v1225, %v1226
      %v1230 = vadd.f32 %v1229, %v1227
      %v1231 = vadd.f32 %v1230, %v1228
      %1232 = vadd.xlane.f32.xlu0 %v1231
      %v1233 = vpop.xlane.xlu0 %1232
      %v1234 = vmul.f32 %v1224, 0.001953125
      %v1235 = vmul.f32 %v1233, 0.001953125
      %v1236 = vmul.f32 %v1234, %v1234
      %v1237 = vsub.f32 %v1235, %v1236
      %v1238 = vmax.f32 %v1237, 0.0
      %v1239 = vld [vmem:[%s356] sm:$0xff]
      %v1240 = vadd.f32 %v1238, 1e-05
      %v1241 = vrsqrt.pop %v1240
      %v1242 = vmul.f32 %v1239, %v1241
      %v1243 = vld [vmem:[%s360] sm:$0xff]
      %v1244 = vmul.f32 %v1234, %v1242
      %v1245 = vsub.f32 %v1243, %v1244
      %1247 = vset.pattern.permute.xlu0 0
      %1248 = vperm.xlu0 %1247, %v1242
      %v1249 = vpop.permute.xlu0 %1248
      %v1251 = vmul.f32 %v1145, %v1249
      %v1252 = vmul.f32 %v1147, %v1249
      %v1253 = vmul.f32 %v1216, %v1249
      %v1254 = vmul.f32 %v1218, %v1249
      %1256 = vset.pattern.permute.xlu0 0
      %1257 = vperm.xlu0 %1256, %v1245
      %v1258 = vpop.permute.xlu0 %1257
      %v1260 = vadd.f32 %v1251, %v1258
      %v1261 = vadd.f32 %v1252, %v1258
      %v1262 = vadd.f32 %v1253, %v1258
      %v1263 = vadd.f32 %v1254, %v1258
      %v1264 = vmax.f32 %v1260, 0.0
      %v1265 = vmax.f32 %v1261, 0.0
      %v1266 = vmax.f32 %v1262, 0.0
      %v1267 = vmax.f32 %v1263, 0.0
      %v1268 = vld [vmem:[%s364] sm:$0xff]
      %1269 = vst [vmem:[#allocation2 + $0x8] sm:$0xff] %v1264
      %1270 = vst [vmem:[#allocation2 + $0x10] sm:$0xff] %v1265
      %1271 = vst [vmem:[#allocation2 + $0x18] sm:$0xff] %v1266
      %1272 = vst [vmem:[#allocation2 + $0x20] sm:$0xff] %v1267
      %v1273 = vld [vmem:[#allocation2] sm:$0xff]
      %v1274 = vld [vmem:[#allocation2 + $0x8] sm:$0xff]
      %v1275 = vld [vmem:[#allocation2 + $0x10] sm:$0xff]
      %v1276 = vld [vmem:[#allocation2 + $0x18] sm:$0xff]
      %v1277 = vld [vmem:[#allocation2 + $0x20] sm:$0xff]
      %v1278 = vmul.f32 %v1273, %v434
      %v1279 = vmul.f32 %v1274, %v442
      %v1280 = vmul.f32 %v1275, %v443
      %v1281 = vmul.f32 %v1276, %v444
      %v1282 = vmul.f32 %v1277, %v440
      %v1283 = vmul.f32 %v1273, %v476
      %v1284 = vmul.f32 %v1274, %v484
      %v1285 = vmul.f32 %v1275, %v485
      %v1286 = vmul.f32 %v1276, %v486
      %v1287 = vmul.f32 %v1277, %v482
      %v1288 = vmul.f32 %v1273, %v518
      %v1289 = vmul.f32 %v1274, %v526
      %v1290 = vmul.f32 %v1275, %v527
      %v1291 = vmul.f32 %v1276, %v528
      %v1292 = vmul.f32 %v1277, %v524
      %v1293 = vmul.f32 %v1273, %v560
      %v1294 = vmul.f32 %v1274, %v568
      %v1295 = vmul.f32 %v1275, %v569
      %v1296 = vmul.f32 %v1276, %v570
      %v1297 = vmul.f32 %v1277, %v566
      %v1298 = vld [vmem:[#allocation2 + $0x8] sm:$0xff]
      %v1299 = vld [vmem:[#allocation2 + $0x10] sm:$0xff]
      %v1300 = vld [vmem:[#allocation2 + $0x18] sm:$0xff]
      %v1301 = vld [vmem:[#allocation2 + $0x20] sm:$0xff]
      %v1302 = vld [vmem:[#allocation2 + $0x28] sm:$0xff]
      %v1303 = vmul.f32 %v1298, %v607
      %v1304 = vmul.f32 %v1299, %v615
      %v1305 = vmul.f32 %v1300, %v616
      %v1306 = vmul.f32 %v1301, %v617
      %v1307 = vmul.f32 %v1302, %v613
      %v1308 = vmul.f32 %v1298, %v649
      %v1309 = vmul.f32 %v1299, %v657
      %v1310 = vmul.f32 %v1300, %v658
      %v1311 = vmul.f32 %v1301, %v659
      %v1312 = vmul.f32 %v1302, %v655
      %v1313 = vmul.f32 %v1298, %v691
      %v1314 = vmul.f32 %v1299, %v699
      %v1315 = vmul.f32 %v1300, %v700
      %v1316 = vmul.f32 %v1301, %v701
      %v1317 = vmul.f32 %v1302, %v697
      %v1318 = vmul.f32 %v1298, %v733
      %v1319 = vmul.f32 %v1299, %v741
      %v1320 = vmul.f32 %v1300, %v742
      %v1321 = vmul.f32 %v1301, %v743
      %v1322 = vmul.f32 %v1302, %v739
      %1328 = vrot.lane.b32.xlu0 %v1283, 127
      %v1329 = vpop.permute.xlu0 %1328
      %1330 = vrot.lane.b32.xlu0 %v1284, 127
      %v1331 = vpop.permute.xlu0 %1330
      %1332 = vrot.lane.b32.xlu0 %v1285, 127
      %v1333 = vpop.permute.xlu0 %1332
      %1334 = vrot.lane.b32.xlu0 %v1286, 127
      %v1335 = vpop.permute.xlu0 %1334
      %1336 = vrot.lane.b32.xlu0 %v1287, 127
      %v1337 = vpop.permute.xlu0 %1336
      %v1338 = vsel %vm567, %v1329, %v1331
      %v1339 = vsel %vm567, %v1331, %v1333
      %v1340 = vsel %vm567, %v1333, %v1335
      %v1341 = vsel %vm567, %v1335, %v1337
      %1347 = vrot.lane.b32.xlu0 %v1288, 126
      %v1348 = vpop.permute.xlu0 %1347
      %1349 = vrot.lane.b32.xlu0 %v1289, 126
      %v1350 = vpop.permute.xlu0 %1349
      %1351 = vrot.lane.b32.xlu0 %v1290, 126
      %v1352 = vpop.permute.xlu0 %1351
      %1353 = vrot.lane.b32.xlu0 %v1291, 126
      %v1354 = vpop.permute.xlu0 %1353
      %1355 = vrot.lane.b32.xlu0 %v1292, 126
      %v1356 = vpop.permute.xlu0 %1355
      %v1357 = vsel %vm788, %v1348, %v1350
      %v1358 = vsel %vm788, %v1350, %v1352
      %v1359 = vsel %vm788, %v1352, %v1354
      %v1360 = vsel %vm788, %v1354, %v1356
      %1366 = vrot.lane.b32.xlu0 %v1293, 112
      %v1367 = vpop.permute.xlu0 %1366
      %1368 = vrot.lane.b32.xlu0 %v1294, 112
      %v1369 = vpop.permute.xlu0 %1368
      %1370 = vrot.lane.b32.xlu0 %v1295, 112
      %v1371 = vpop.permute.xlu0 %1370
      %1372 = vrot.lane.b32.xlu0 %v1296, 112
      %v1373 = vpop.permute.xlu0 %1372
      %1374 = vrot.lane.b32.xlu0 %v1297, 112
      %v1375 = vpop.permute.xlu0 %1374
      %v1376 = vsel %vm483, %v1367, %v1369
      %v1377 = vsel %vm483, %v1369, %v1371
      %v1378 = vsel %vm483, %v1371, %v1373
      %v1379 = vsel %vm483, %v1373, %v1375
      %1384 = vrot.lane.b32.xlu0 %v1274, 111
      %v1385 = vpop.permute.xlu0 %1384
      %1386 = vrot.lane.b32.xlu0 %v1275, 111
      %v1387 = vpop.permute.xlu0 %1386
      %1388 = vrot.lane.b32.xlu0 %v1276, 111
      %v1389 = vpop.permute.xlu0 %1388
      %1390 = vrot.lane.b32.xlu0 %v1277, 111
      %v1391 = vpop.permute.xlu0 %1390
      %v1392 = vsel %vm441, %v1385, %v1387
      %v1393 = vsel %vm441, %v1387, %v1389
      %v1394 = vsel %vm441, %v1389, %v1391
      %1400 = vrot.lane.b32.xlu0 %v1303, 110
      %v1401 = vpop.permute.xlu0 %1400
      %1402 = vrot.lane.b32.xlu0 %v1304, 110
      %v1403 = vpop.permute.xlu0 %1402
      %1404 = vrot.lane.b32.xlu0 %v1305, 110
      %v1405 = vpop.permute.xlu0 %1404
      %1406 = vrot.lane.b32.xlu0 %v1306, 110
      %v1407 = vpop.permute.xlu0 %1406
      %1408 = vrot.lane.b32.xlu0 %v1307, 110
      %v1409 = vpop.permute.xlu0 %1408
      %v1410 = vsel %vm842, %v1401, %v1403
      %v1411 = vsel %vm842, %v1403, %v1405
      %v1412 = vsel %vm842, %v1405, %v1407
      %v1413 = vsel %vm842, %v1407, %v1409
      %1419 = vrot.lane.b32.xlu0 %v1308, 96
      %v1420 = vpop.permute.xlu0 %1419
      %1421 = vrot.lane.b32.xlu0 %v1309, 96
      %v1422 = vpop.permute.xlu0 %1421
      %1423 = vrot.lane.b32.xlu0 %v1310, 96
      %v1424 = vpop.permute.xlu0 %1423
      %1425 = vrot.lane.b32.xlu0 %v1311, 96
      %v1426 = vpop.permute.xlu0 %1425
      %1427 = vrot.lane.b32.xlu0 %v1312, 96
      %v1428 = vpop.permute.xlu0 %1427
      %v1429 = vsel %vm862, %v1420, %v1422
      %v1430 = vsel %vm862, %v1422, %v1424
      %v1431 = vsel %vm862, %v1424, %v1426
      %v1432 = vsel %vm862, %v1426, %v1428
      %1438 = vrot.lane.b32.xlu0 %v1313, 95
      %v1439 = vpop.permute.xlu0 %1438
      %1440 = vrot.lane.b32.xlu0 %v1314, 95
      %v1441 = vpop.permute.xlu0 %1440
      %1442 = vrot.lane.b32.xlu0 %v1315, 95
      %v1443 = vpop.permute.xlu0 %1442
      %1444 = vrot.lane.b32.xlu0 %v1316, 95
      %v1445 = vpop.permute.xlu0 %1444
      %1446 = vrot.lane.b32.xlu0 %v1317, 95
      %v1447 = vpop.permute.xlu0 %1446
      %v1448 = vsel %vm882, %v1439, %v1441
      %v1449 = vsel %vm882, %v1441, %v1443
      %v1450 = vsel %vm882, %v1443, %v1445
      %v1451 = vsel %vm882, %v1445, %v1447
      %1457 = vrot.lane.b32.xlu0 %v1318, 94
      %v1458 = vpop.permute.xlu0 %1457
      %1459 = vrot.lane.b32.xlu0 %v1319, 94
      %v1460 = vpop.permute.xlu0 %1459
      %1461 = vrot.lane.b32.xlu0 %v1320, 94
      %v1462 = vpop.permute.xlu0 %1461
      %1463 = vrot.lane.b32.xlu0 %v1321, 94
      %v1464 = vpop.permute.xlu0 %1463
      %1465 = vrot.lane.b32.xlu0 %v1322, 94
      %v1466 = vpop.permute.xlu0 %1465
      %v1467 = vsel %vm902, %v1458, %v1460
      %v1468 = vsel %vm902, %v1460, %v1462
      %v1469 = vsel %vm902, %v1462, %v1464
      %v1470 = vsel %vm902, %v1464, %v1466
      %1476 = vrot.lane.b32.xlu0 %v1278, 17
      %v1477 = vpop.permute.xlu0 %1476
      %1478 = vrot.lane.b32.xlu0 %v1279, 17
      %v1479 = vpop.permute.xlu0 %1478
      %1480 = vrot.lane.b32.xlu0 %v1280, 17
      %v1481 = vpop.permute.xlu0 %1480
      %1482 = vrot.lane.b32.xlu0 %v1281, 17
      %v1483 = vpop.permute.xlu0 %1482
      %1484 = vrot.lane.b32.xlu0 %v1282, 17
      %v1485 = vpop.permute.xlu0 %1484
      %1486 = vrot.lane.b32.xlu0 %v1338, 17
      %v1487 = vpop.permute.xlu0 %1486
      %1488 = vrot.lane.b32.xlu0 %v1339, 17
      %v1489 = vpop.permute.xlu0 %1488
      %1490 = vrot.lane.b32.xlu0 %v1340, 17
      %v1491 = vpop.permute.xlu0 %1490
      %1492 = vrot.lane.b32.xlu0 %v1341, 17
      %v1493 = vpop.permute.xlu0 %1492
      %1494 = vrot.lane.b32.xlu0 %v1337, 17
      %v1495 = vpop.permute.xlu0 %1494
      %1496 = vrot.lane.b32.xlu0 %v1357, 17
      %v1497 = vpop.permute.xlu0 %1496
      %1498 = vrot.lane.b32.xlu0 %v1358, 17
      %v1499 = vpop.permute.xlu0 %1498
      %1500 = vrot.lane.b32.xlu0 %v1359, 17
      %v1501 = vpop.permute.xlu0 %1500
      %1502 = vrot.lane.b32.xlu0 %v1360, 17
      %v1503 = vpop.permute.xlu0 %1502
      %1504 = vrot.lane.b32.xlu0 %v1356, 17
      %v1505 = vpop.permute.xlu0 %1504
      %1506 = vrot.lane.b32.xlu0 %v1376, 17
      %v1507 = vpop.permute.xlu0 %1506
      %1508 = vrot.lane.b32.xlu0 %v1377, 17
      %v1509 = vpop.permute.xlu0 %1508
      %1510 = vrot.lane.b32.xlu0 %v1378, 17
      %v1511 = vpop.permute.xlu0 %1510
      %1512 = vrot.lane.b32.xlu0 %v1379, 17
      %v1513 = vpop.permute.xlu0 %1512
      %1514 = vrot.lane.b32.xlu0 %v1375, 17
      %v1515 = vpop.permute.xlu0 %1514
      %1516 = vrot.lane.b32.xlu0 %v1385, 17
      %v1517 = vpop.permute.xlu0 %1516
      %1518 = vrot.lane.b32.xlu0 %v1392, 17
      %v1519 = vpop.permute.xlu0 %1518
      %1520 = vrot.lane.b32.xlu0 %v1393, 17
      %v1521 = vpop.permute.xlu0 %1520
      %1522 = vrot.lane.b32.xlu0 %v1394, 17
      %v1523 = vpop.permute.xlu0 %1522
      %1524 = vrot.lane.b32.xlu0 %v1391, 17
      %v1525 = vpop.permute.xlu0 %1524
      %1526 = vrot.lane.b32.xlu0 %v1401, 17
      %v1527 = vpop.permute.xlu0 %1526
      %1528 = vrot.lane.b32.xlu0 %v1410, 17
      %v1529 = vpop.permute.xlu0 %1528
      %1530 = vrot.lane.b32.xlu0 %v1411, 17
      %v1531 = vpop.permute.xlu0 %1530
      %1532 = vrot.lane.b32.xlu0 %v1412, 17
      %v1533 = vpop.permute.xlu0 %1532
      %1534 = vrot.lane.b32.xlu0 %v1413, 17
      %v1535 = vpop.permute.xlu0 %1534
      %1536 = vrot.lane.b32.xlu0 %v1420, 17
      %v1537 = vpop.permute.xlu0 %1536
      %1538 = vrot.lane.b32.xlu0 %v1429, 17
      %v1539 = vpop.permute.xlu0 %1538
      %1540 = vrot.lane.b32.xlu0 %v1430, 17
      %v1541 = vpop.permute.xlu0 %1540
      %1542 = vrot.lane.b32.xlu0 %v1431, 17
      %v1543 = vpop.permute.xlu0 %1542
      %1544 = vrot.lane.b32.xlu0 %v1432, 17
      %v1545 = vpop.permute.xlu0 %1544
      %1546 = vrot.lane.b32.xlu0 %v1439, 17
      %v1547 = vpop.permute.xlu0 %1546
      %1548 = vrot.lane.b32.xlu0 %v1448, 17
      %v1549 = vpop.permute.xlu0 %1548
      %1550 = vrot.lane.b32.xlu0 %v1449, 17
      %v1551 = vpop.permute.xlu0 %1550
      %1552 = vrot.lane.b32.xlu0 %v1450, 17
      %v1553 = vpop.permute.xlu0 %1552
      %1554 = vrot.lane.b32.xlu0 %v1451, 17
      %v1555 = vpop.permute.xlu0 %1554
      %1556 = vrot.lane.b32.xlu0 %v1458, 17
      %v1557 = vpop.permute.xlu0 %1556
      %1558 = vrot.lane.b32.xlu0 %v1467, 17
      %v1559 = vpop.permute.xlu0 %1558
      %1560 = vrot.lane.b32.xlu0 %v1468, 17
      %v1561 = vpop.permute.xlu0 %1560
      %1562 = vrot.lane.b32.xlu0 %v1469, 17
      %v1563 = vpop.permute.xlu0 %1562
      %1564 = vrot.lane.b32.xlu0 %v1470, 17
      %v1565 = vpop.permute.xlu0 %1564
      %v1566 = vsel %vm740, %v1477, %v1479
      %v1567 = vsel %vm740, %v1479, %v1481
      %v1568 = vsel %vm740, %v1481, %v1483
      %v1569 = vsel %vm740, %v1483, %v1485
      %v1570 = vsel %vm740, %v1487, %v1489
      %v1571 = vsel %vm740, %v1489, %v1491
      %v1572 = vsel %vm740, %v1491, %v1493
      %v1573 = vsel %vm740, %v1493, %v1495
      %v1574 = vsel %vm740, %v1497, %v1499
      %v1575 = vsel %vm740, %v1499, %v1501
      %v1576 = vsel %vm740, %v1501, %v1503
      %v1577 = vsel %vm740, %v1503, %v1505
      %v1578 = vsel %vm740, %v1507, %v1509
      %v1579 = vsel %vm740, %v1509, %v1511
      %v1580 = vsel %vm740, %v1511, %v1513
      %v1581 = vsel %vm740, %v1513, %v1515
      %v1582 = vsel %vm740, %v1517, %v1519
      %v1583 = vsel %vm740, %v1519, %v1521
      %v1584 = vsel %vm740, %v1521, %v1523
      %v1585 = vsel %vm740, %v1523, %v1525
      %v1586 = vsel %vm740, %v1527, %v1529
      %v1587 = vsel %vm740, %v1529, %v1531
      %v1588 = vsel %vm740, %v1531, %v1533
      %v1589 = vsel %vm740, %v1533, %v1535
      %v1590 = vsel %vm740, %v1537, %v1539
      %v1591 = vsel %vm740, %v1539, %v1541
      %v1592 = vsel %vm740, %v1541, %v1543
      %v1593 = vsel %vm740, %v1543, %v1545
      %v1594 = vsel %vm740, %v1547, %v1549
      %v1595 = vsel %vm740, %v1549, %v1551
      %v1596 = vsel %vm740, %v1551, %v1553
      %v1597 = vsel %vm740, %v1553, %v1555
      %v1598 = vsel %vm740, %v1557, %v1559
      %v1599 = vsel %vm740, %v1559, %v1561
      %v1600 = vsel %vm740, %v1561, %v1563
      %v1601 = vsel %vm740, %v1563, %v1565
      %v1639 = vsel %vm1074, %v1268, 0
      %1641 = vmatprep.subr.mxu0 %v1567
      %1642 = vmatpush1.msra.mxu0 %v1566
      %1643 = vmatprep.subr.mxu0 %v1571
      %1644 = vmatpush1.msra.mxu0 %v1570
      %1645 = vmatprep.subr.mxu0 %v1575
      %1646 = vmatpush1.msra.mxu0 %v1574
      %1647 = vmatprep.subr.mxu0 %v1579
      %1648 = vmatpush1.msra.mxu0 %v1578
      %1649 = vmatprep.subr.mxu0 %v1583
      %1650 = vmatpush1.msra.mxu0 %v1582
      %1651 = vmatprep.subr.mxu0 %v1587
      %1652 = vmatpush1.msra.mxu0 %v1586
      %1653 = vmatprep.subr.mxu0 %v1591
      %1654 = vmatpush1.msra.mxu0 %v1590
      %1655 = vmatprep.subr.mxu0 %v1595
      %1656 = vmatpush1.msra.mxu0 %v1594
      %1657 = vmatprep.subr.mxu0 %v1599
      %1658 = vmatpush1.msra.mxu0 %v1598
      %1659 = vmatprep.subr.mxu0 0.0
      %1660 = vmatpush1.msra.mxu0 0.0
      %1661 = vmatprep.subr.mxu0 0.0
      %1662 = vmatpush1.msra.mxu0 0.0
      %1663 = vmatprep.subr.mxu0 0.0
      %1664 = vmatpush1.msra.mxu0 0.0
      %1665 = vmatprep.subr.mxu0 0.0
      %1666 = vmatpush1.msra.mxu0 0.0
      %1667 = vmatprep.subr.mxu0 0.0
      %1668 = vmatpush1.msra.mxu0 0.0
      %1669 = vmatprep.subr.mxu0 0.0
      %1670 = vmatpush1.msra.mxu0 0.0
      %1671 = vmatprep.subr.mxu0 0.0
      %1672 = vmatpush1.msra.mxu0 0.0
      %1673 = vmatprep.subr.mxu0 0.0
      %1674 = vmatpush1.msra.mxu0 0.0
      %1675 = vmatprep.subr.mxu0 0.0
      %1676 = vmatpush1.msra.mxu0 0.0
      %1677 = vmatprep.subr.mxu0 0.0
      %1678 = vmatpush1.msra.mxu0 0.0
      %1679 = vmatprep.subr.mxu0 0.0
      %1680 = vmatpush1.msra.mxu0 0.0
      %1681 = vmatprep.subr.mxu0 0.0
      %1682 = vmatpush1.msra.mxu0 0.0
      %1683 = vmatprep.subr.mxu0 0.0
      %1684 = vmatpush1.msra.mxu0 0.0
      %1685 = vmatprep.subr.mxu0 0.0
      %1686 = vmatpush1.msra.mxu0 0.0
      %1687 = vmatprep.subr.mxu0 0.0
      %1688 = vmatpush1.msra.mxu0 0.0
      %1689 = vmatprep.subr.mxu0 0.0
      %1690 = vmatpush1.msra.mxu0 0.0
      %1691 = vmatprep.subr.mxu0 0.0
      %1692 = vmatpush1.msra.mxu0 0.0
      %1693 = vmatprep.subr.mxu0 0.0
      %1694 = vmatpush1.msra.mxu0 0.0
      %1695 = vmatprep.subr.mxu0 0.0
      %1696 = vmatpush1.msra.mxu0 0.0
      %1697 = vmatprep.subr.mxu0 0.0
      %1698 = vmatpush1.msra.mxu0 0.0
      %1699 = vmatprep.subr.mxu0 0.0
      %1700 = vmatpush1.msra.mxu0 0.0
      %1701 = vmatprep.subr.mxu0 0.0
      %1702 = vmatpush1.msra.mxu0 0.0
      %1703 = vmatprep.subr.mxu0 0.0
      %1704 = vmatpush1.msra.mxu0 0.0
      %1705 = vmatprep.mubr.f32.mxu0 0.0
      %1706 = vmatmul.mubr.f32.gmra.mrb[0].mxu0 %v1639
      %v1707 = vpop.f32.mrb[0].mxu0
      %v1708 = vadd.f32 0.0, %v1707
      %v1709 = vpop.f32.mrb[0].mxu0
      %v1710 = vadd.f32 0.0, %v1709
      %1711 = vdwg.mxu0
      %1712 = vmatprep.subr.mxu0 %v1569
      %1713 = vmatpush1.msra.mxu0 %v1568
      %1714 = vmatprep.subr.mxu0 %v1573
      %1715 = vmatpush1.msra.mxu0 %v1572
      %1716 = vmatprep.subr.mxu0 %v1577
      %1717 = vmatpush1.msra.mxu0 %v1576
      %1718 = vmatprep.subr.mxu0 %v1581
      %1719 = vmatpush1.msra.mxu0 %v1580
      %1720 = vmatprep.subr.mxu0 %v1585
      %1721 = vmatpush1.msra.mxu0 %v1584
      %1722 = vmatprep.subr.mxu0 %v1589
      %1723 = vmatpush1.msra.mxu0 %v1588
      %1724 = vmatprep.subr.mxu0 %v1593
      %1725 = vmatpush1.msra.mxu0 %v1592
      %1726 = vmatprep.subr.mxu0 %v1597
      %1727 = vmatpush1.msra.mxu0 %v1596
      %1728 = vmatprep.subr.mxu0 %v1601
      %1729 = vmatpush1.msra.mxu0 %v1600
      %1730 = vmatprep.subr.mxu0 0.0
      %1731 = vmatpush1.msra.mxu0 0.0
      %1732 = vmatprep.subr.mxu0 0.0
      %1733 = vmatpush1.msra.mxu0 0.0
      %1734 = vmatprep.subr.mxu0 0.0
      %1735 = vmatpush1.msra.mxu0 0.0
      %1736 = vmatprep.subr.mxu0 0.0
      %1737 = vmatpush1.msra.mxu0 0.0
      %1738 = vmatprep.subr.mxu0 0.0
      %1739 = vmatpush1.msra.mxu0 0.0
      %1740 = vmatprep.subr.mxu0 0.0
      %1741 = vmatpush1.msra.mxu0 0.0
      %1742 = vmatprep.subr.mxu0 0.0
      %1743 = vmatpush1.msra.mxu0 0.0
      %1744 = vmatprep.subr.mxu0 0.0
      %1745 = vmatpush1.msra.mxu0 0.0
      %1746 = vmatprep.subr.mxu0 0.0
      %1747 = vmatpush1.msra.mxu0 0.0
      %1748 = vmatprep.subr.mxu0 0.0
      %1749 = vmatpush1.msra.mxu0 0.0
      %1750 = vmatprep.subr.mxu0 0.0
      %1751 = vmatpush1.msra.mxu0 0.0
      %1752 = vmatprep.subr.mxu0 0.0
      %1753 = vmatpush1.msra.mxu0 0.0
      %1754 = vmatprep.subr.mxu0 0.0
      %1755 = vmatpush1.msra.mxu0 0.0
      %1756 = vmatprep.subr.mxu0 0.0
      %1757 = vmatpush1.msra.mxu0 0.0
      %1758 = vmatprep.subr.mxu0 0.0
      %1759 = vmatpush1.msra.mxu0 0.0
      %1760 = vmatprep.subr.mxu0 0.0
      %1761 = vmatpush1.msra.mxu0 0.0
      %1762 = vmatprep.subr.mxu0 0.0
      %1763 = vmatpush1.msra.mxu0 0.0
      %1764 = vmatprep.subr.mxu0 0.0
      %1765 = vmatpush1.msra.mxu0 0.0
      %1766 = vmatprep.subr.mxu0 0.0
      %1767 = vmatpush1.msra.mxu0 0.0
      %1768 = vmatprep.subr.mxu0 0.0
      %1769 = vmatpush1.msra.mxu0 0.0
      %1770 = vmatprep.subr.mxu0 0.0
      %1771 = vmatpush1.msra.mxu0 0.0
      %1772 = vmatprep.subr.mxu0 0.0
      %1773 = vmatpush1.msra.mxu0 0.0
      %1774 = vmatprep.subr.mxu0 0.0
      %1775 = vmatpush1.msra.mxu0 0.0
      %1776 = vmatprep.mubr.f32.mxu0 0.0
      %1777 = vmatmul.mubr.f32.gmra.mrb[0].mxu0 %v1639
      %v1778 = vpop.f32.mrb[0].mxu0
      %v1779 = vadd.f32 0.0, %v1778
      %v1780 = vpop.f32.mrb[0].mxu0
      %v1781 = vadd.f32 0.0, %v1780
      %1782 = vdwg.mxu0
      %v1783 = vadd.f32 %v1708, %v1710
      %v1784 = vadd.f32 %v1783, %v1779
      %v1785 = vadd.f32 %v1784, %v1781
      %1786 = vadd.xlane.f32.xlu0 %v1785
      %v1787 = vpop.xlane.xlu0 %1786
      %v1788 = vmul.f32 %v1708, %v1708
      %v1789 = vmul.f32 %v1710, %v1710
      %v1790 = vmul.f32 %v1779, %v1779
      %v1791 = vmul.f32 %v1781, %v1781
      %v1792 = vadd.f32 %v1788, %v1789
      %v1793 = vadd.f32 %v1792, %v1790
      %v1794 = vadd.f32 %v1793, %v1791
      %1795 = vadd.xlane.f32.xlu0 %v1794
      %v1796 = vpop.xlane.xlu0 %1795
      %v1797 = vmul.f32 %v1787, 0.001953125
      %v1798 = vmul.f32 %v1796, 0.001953125
      %v1799 = vmul.f32 %v1797, %v1797
      %v1800 = vsub.f32 %v1798, %v1799
      %v1801 = vmax.f32 %v1800, 0.0
      %v1802 = vld [vmem:[%s368] sm:$0xff]
      %v1803 = vadd.f32 %v1801, 1e-05
      %v1804 = vrsqrt.pop %v1803
      %v1805 = vmul.f32 %v1802, %v1804
      %v1806 = vld [vmem:[%s372] sm:$0xff]
      %v1807 = vmul.f32 %v1797, %v1805
      %v1808 = vsub.f32 %v1806, %v1807
      %1810 = vset.pattern.permute.xlu0 0
      %1811 = vperm.xlu0 %1810, %v1805
      %v1812 = vpop.permute.xlu0 %1811
      %v1814 = vmul.f32 %v1708, %v1812
      %v1815 = vmul.f32 %v1710, %v1812
      %v1816 = vmul.f32 %v1779, %v1812
      %v1817 = vmul.f32 %v1781, %v1812
      %1819 = vset.pattern.permute.xlu0 0
      %1820 = vperm.xlu0 %1819, %v1808
      %v1821 = vpop.permute.xlu0 %1820
      %v1823 = vadd.f32 %v1814, %v1821
      %v1824 = vadd.f32 %v1815, %v1821
      %v1825 = vadd.f32 %v1816, %v1821
      %v1826 = vadd.f32 %v1817, %v1821
      %v1827 = vadd.f32 %v1823, %v399
      %v1828 = vadd.f32 %v1824, %v400
      %v1829 = vadd.f32 %v1825, %v401
      %v1830 = vadd.f32 %v1826, %v402
      %1831 = vst [vmem:[%s8] sm:$0xff] %v1827
      %1832 = vst [vmem:[%s8 + $0x8] sm:$0xff] %v1828
      %1833 = vst [vmem:[%s8 + $0x10] sm:$0xff] %v1829
      %1834 = vst [vmem:[%s8 + $0x18] sm:$0xff] %v1830
      // Predicated region
      $region57: #{eblock_pallas.1} parent=51 // pred_check
        %p1835 = pneg %p230
      $region58: #{eblock_pallas.1} parent=51 // pred_check_branch
        %1837 = sbr.rel (%p1835) target = $region60
      $region59: #{eblock_pallas.1} parent=51 // pred_region
        _
      $region60: #{eblock_pallas.1} parent=51 // pred_fallthru
        _
      // Predicated region
      $region61: #{eblock_pallas.1} parent=51 // pred_check
        %p1838 = pneg %p230
      $region62: #{eblock_pallas.1} parent=51 // pred_check_branch
        %1840 = sbr.rel (%p1838) target = $region64
      $region63: #{eblock_pallas.1} parent=51 // pred_region
        _
      $region64: #{eblock_pallas.1} parent=51 // pred_fallthru
        _
    $region52: #{eblock_pallas.1} parent=5 // pred_fallthru
      _
    %p1841 = scmp.le.s32.totalorder 2, %s14
    // Predicated region
    $region65: #{eblock_pallas.1} parent=5 // pred_check
      %p1842 = pneg %p1841
    $region66: #{eblock_pallas.1} parent=5 // pred_check_branch
      %1844 = sbr.rel (%p1842) target = $region68
    $region67: #{eblock_pallas.1} parent=5 // pred_region
      %s1845 = ssub.s32 %s14, 2
    $region68: #{eblock_pallas.1} parent=5 // pred_fallthru
      _
  $region6: #{eblock_pallas.1} parent=0 // loop_footer
    %s18 = sadd.s32 1, %s14
  $region7: #{eblock_pallas.1} parent=0 // loop_footer_branch
    %13 = sbr.rel target = $region3
  $region8: #{eblock_pallas.1} parent=0 // loop_exit
    _

</llo_original>
